<compile_context>
chip_gen: v6e
topology: v6e:2x2x1
jax: 0.10.0
libtpu: 0.0.40
codegen_flags: <defaults>
</compile_context>

<pallas_src>
import jax
import jax.numpy as jnp
from jax.experimental import pallas as pl
from jax.experimental.pallas import tpu as pltpu


def _ffn_kernel(x_ref, w1_ref, b1_ref, w2_ref, b2_ref, g_ref, beta_ref,
                o_ref, acc_ref):
    # Grid: (token tiles [parallel], hidden tiles [arbitrary/reduction]).
    k = pl.program_id(1)

    @pl.when(k == 0)
    def _():
        acc_ref[...] = jnp.zeros_like(acc_ref)

    # ---- Linear(D -> th slice) + exact (erf) GELU, math in f32 ----
    x_bf = x_ref[...].astype(jnp.bfloat16)
    h = jnp.dot(x_bf, w1_ref[...], preferred_element_type=jnp.float32)
    h = h + b1_ref[...]
    h = 0.5 * h * (1.0 + jax.lax.erf(h * 0.7071067811865476))

    # TODO(synk): nn.Dropout is identity in eval mode; no RNG masking applied.

    # ---- partial Linear(th slice -> D), accumulated in f32 ----
    acc_ref[...] += jnp.dot(h.astype(jnp.bfloat16), w2_ref[...],
                            preferred_element_type=jnp.float32)

    # ---- finalize on the last hidden tile: bias + residual + LayerNorm ----
    @pl.when(k == pl.num_programs(1) - 1)
    def _():
        y = acc_ref[...] + b2_ref[...] + x_ref[...].astype(jnp.float32)
        mean = jnp.mean(y, axis=-1, keepdims=True)
        var = jnp.mean((y - mean) * (y - mean), axis=-1, keepdims=True)
        y_hat = (y - mean) * jax.lax.rsqrt(var + 1e-5)
        o_ref[...] = (y_hat * g_ref[...] + beta_ref[...]).astype(o_ref.dtype)


def _round_up(a, b):
    return ((a + b - 1) // b) * b


def feed_forward_net(x, w1, b1, w2, b2, gamma, beta, *, tm=256, th=2048):
    """x: (B, S, D) float32.  Weights use the y = x @ W + b convention
    (w1 = torch_linear1.weight.T, etc.)."""
    B, S, D = x.shape
    H = w1.shape[1]
    N = B * S

    # --- tile selection (clamped so small demo shapes still work) ---
    tm = min(tm, _round_up(N, 8))
    th = min(th, H)
    if H % th != 0:
        th = H                      # fall back to un-tiled hidden dim
    n_pad = _round_up(N, tm)

    # --- flatten / pad tokens / dtype prep ---
    x2 = x.reshape(N, D)
    if n_pad != N:
        x2 = jnp.pad(x2, ((0, n_pad - N), (0, 0)))
    w1_bf = w1.astype(jnp.bfloat16)          # MXU operands in bf16
    w2_bf = w2.astype(jnp.bfloat16)
    b1_2 = b1.reshape(1, H).astype(jnp.float32)
    b2_2 = b2.reshape(1, D).astype(jnp.float32)
    g_2 = gamma.reshape(1, D).astype(jnp.float32)
    beta_2 = beta.reshape(1, D).astype(jnp.float32)

    # --- VMEM budget: double-buffered streamed blocks + accumulator + temps ---
    needed = (
        2 * (tm * D * 4)            # x tile (double-buffered)
        + 2 * (D * th * 2)          # W1 tile (bf16)
        + 2 * (th * 4)              # b1 tile
        + 2 * (th * D * 2)          # W2 tile (bf16)
        + 2 * 3 * (D * 4)           # b2, gamma, beta
        + 2 * (tm * D * 4)          # out tile
        + (tm * D * 4)              # f32 accumulator scratch
        + 3 * (tm * th * 4)         # hidden-activation temporaries + slack
    )
    vmem_limit = int(min(max(2 * needed, 32 * 1024 * 1024), 128 * 1024 * 1024))

    cost = pl.CostEstimate(
        flops=4 * n_pad * D * H,                       # two matmuls
        transcendentals=n_pad * H,                     # erf on the hidden tile
        bytes_accessed=2 * n_pad * D * 4               # x in + out
        + 2 * D * H * 2                                # bf16 weights
        + (H + 3 * D) * 4,                             # biases / LN params
    )

    grid = (n_pad // tm, H // th)
    out_shape = jax.ShapeDtypeStruct((n_pad, D), x.dtype)

    def _run(single_buffer_consts):
        const_kwargs = (
            dict(pipeline_mode=pl.Buffered(1)) if single_buffer_consts else {}
        )
        in_specs = [
            pl.BlockSpec((tm, D), lambda i, k: (i, 0)),                  # x
            pl.BlockSpec((D, th), lambda i, k: (0, k)),                  # W1
            pl.BlockSpec((1, th), lambda i, k: (0, k)),                  # b1
            pl.BlockSpec((th, D), lambda i, k: (k, 0)),                  # W2
            pl.BlockSpec((1, D), lambda i, k: (0, 0), **const_kwargs),   # b2
            pl.BlockSpec((1, D), lambda i, k: (0, 0), **const_kwargs),   # gamma
            pl.BlockSpec((1, D), lambda i, k: (0, 0), **const_kwargs),   # beta
        ]
        out_specs = pl.BlockSpec((tm, D), lambda i, k: (i, 0))
        fn = pl.pallas_call(
            _ffn_kernel,
            out_shape=out_shape,
            grid_spec=pltpu.PrefetchScalarGridSpec(
                num_scalar_prefetch=0,
                grid=grid,
                in_specs=in_specs,
                out_specs=out_specs,
                scratch_shapes=[pltpu.VMEM((tm, D), jnp.float32)],
            ),
            compiler_params=pltpu.CompilerParams(
                dimension_semantics=("parallel", "arbitrary"),
                vmem_limit_bytes=vmem_limit,
            ),
            cost_estimate=cost,
        )
        out = fn(x2, w1_bf, b1_2, w2_bf, b2_2, g_2, beta_2)
        return jax.block_until_ready(out)

    try:
        out = _run(True)
    except Exception:
        # Some Pallas versions reject single-buffered constant blocks; the
        # default double-buffered path is functionally identical.
        out = _run(False)

    return out[:N].reshape(B, S, D)


def _reference(x, w1, b1, w2, b2, gamma, beta):
    h = jnp.dot(x, w1) + b1
    h = jax.nn.gelu(h, approximate=False)
    y = jnp.dot(h, w2) + b2
    y = y + x
    mean = jnp.mean(y, axis=-1, keepdims=True)
    var = jnp.mean((y - mean) ** 2, axis=-1, keepdims=True)
    return (y - mean) / jnp.sqrt(var + 1e-5) * gamma + beta


if __name__ == "__main__":
    B, S, D = 2, 8, 128          # model_dim = 128 keeps the lane axis dense
    H = 4 * D

    key = jax.random.PRNGKey(0)
    kx, kw1, kb1, kw2, kb2 = jax.random.split(key, 5)

    x = jax.random.normal(kx, (B, S, D), dtype=jnp.float32)

    # Deterministic synthetic parameters (shapes match nn.Linear / nn.LayerNorm).
    w1 = jax.random.normal(kw1, (D, H), dtype=jnp.float32) * 0.05   # Linear(D, 4D).weight.T
    b1 = jax.random.normal(kb1, (H,), dtype=jnp.float32) * 0.05     # Linear(D, 4D).bias
    w2 = jax.random.normal(kw2, (H, D), dtype=jnp.float32) * 0.05   # Linear(4D, D).weight.T
    b2 = jax.random.normal(kb2, (D,), dtype=jnp.float32) * 0.05     # Linear(4D, D).bias
    gamma = jnp.ones((D,), dtype=jnp.float32)                       # LayerNorm.weight
    beta = jnp.zeros((D,), dtype=jnp.float32)                       # LayerNorm.bias

    out = feed_forward_net(x, w1, b1, w2, b2, gamma, beta)
    out = jax.block_until_ready(out)

    ref = _reference(x, w1, b1, w2, b2, gamma, beta)
    assert out.shape == (B, S, D)
    # bf16 MXU operands with f32 accumulation -> loosened tolerance vs f32 ref.
    max_err = float(jnp.max(jnp.abs(out - ref)))
    assert jnp.allclose(out, ref, atol=3e-2, rtol=3e-2), max_err

    print("KERNEL_OK")
</pallas_src>

<mosaic_0001>
module attributes {stable_mosaic.version = 11 : i64} {
  func.func @_ffn_kernel(%arg0: i32, %arg1: i32, %arg2: memref<16x128xf32, #tpu.memory_space<vmem>>, %arg3: memref<128x512xbf16, #tpu.memory_space<vmem>>, %arg4: memref<1x512xf32, #tpu.memory_space<vmem>>, %arg5: memref<512x128xbf16, #tpu.memory_space<vmem>>, %arg6: memref<1x128xf32, #tpu.memory_space<vmem>>, %arg7: memref<1x128xf32, #tpu.memory_space<vmem>>, %arg8: memref<1x128xf32, #tpu.memory_space<vmem>>, %arg9: memref<16x128xf32, #tpu.memory_space<vmem>>, %arg10: memref<16x128xf32, #tpu.memory_space<vmem>>) attributes {dimension_semantics = [#tpu.dimension_semantics<parallel>, #tpu.dimension_semantics<arbitrary>], iteration_bounds = array<i64: 1, 1>, scalar_prefetch = 0 : i64, scratch_operands = 1 : i64, tpu.core_type = #tpu.core_type<tc>, window_params = [{transform_indices = @transform_0, window_bounds = array<i64: 16, 128>}, {transform_indices = @transform_1, window_bounds = array<i64: 128, 512>}, {transform_indices = @transform_2, window_bounds = array<i64: 1, 512>}, {transform_indices = @transform_3, window_bounds = array<i64: 512, 128>}, {pipeline_mode = #tpu.pipeline_mode<synchronous>, transform_indices = @transform_4, window_bounds = array<i64: 1, 128>}, {pipeline_mode = #tpu.pipeline_mode<synchronous>, transform_indices = @transform_5, window_bounds = array<i64: 1, 128>}, {pipeline_mode = #tpu.pipeline_mode<synchronous>, transform_indices = @transform_6, window_bounds = array<i64: 1, 128>}, {transform_indices = @transform_7, window_bounds = array<i64: 16, 128>}]} {
    %c0_i32 = arith.constant 0 : i32
    %0 = arith.cmpi eq, %arg1, %c0_i32 : i32
    %1 = arith.extui %0 : i1 to i32
    %c0_i32_0 = arith.constant 0 : i32
    %2 = arith.cmpi ne, %1, %c0_i32_0 : i32
    scf.if %2 {
      %cst_18 = arith.constant 0.000000e+00 : f32
      %27 = vector.broadcast %cst_18 : f32 to vector<16x128xf32>
      %c0_19 = arith.constant 0 : index
      %c0_20 = arith.constant 0 : index
      %28 = vector.load %arg10[%c0_19, %c0_20] : memref<16x128xf32, #tpu.memory_space<vmem>>, vector<16x128xf32>
      tpu.vector_store %arg10[%c0_19, %c0_20], %27 {strides = array<i32>} : memref<16x128xf32, #tpu.memory_space<vmem>>, vector<16x128xf32>,
    } else {
    }
    %c0 = arith.constant 0 : index
    %c0_1 = arith.constant 0 : index
    %3 = vector.load %arg2[%c0, %c0_1] : memref<16x128xf32, #tpu.memory_space<vmem>>, vector<16x128xf32>
    %4 = arith.truncf %3 : vector<16x128xf32> to vector<16x128xbf16>
    %c0_2 = arith.constant 0 : index
    %c0_3 = arith.constant 0 : index
    %5 = vector.load %arg3[%c0_2, %c0_3] : memref<128x512xbf16, #tpu.memory_space<vmem>>, vector<128x512xbf16>
    %cst = arith.constant dense<0.000000e+00> : vector<16x512xf32>
    %6 = tpu.matmul %4, %5, %cst {dimension_numbers = #tpu.dot_dimension_numbers<[1], [0], [0], [1], [0, 0, 1, 1], [], []>} : vector<16x128xbf16>, vector<128x512xbf16>, vector<16x512xf32> -> vector<16x512xf32>
    %c0_4 = arith.constant 0 : index
    %c0_5 = arith.constant 0 : index
    %7 = vector.load %arg4[%c0_4, %c0_5] : memref<1x512xf32, #tpu.memory_space<vmem>>, vector<1x512xf32>
    %8 = vector.broadcast %7 : vector<1x512xf32> to vector<16x512xf32>
    %9 = arith.addf %6, %8 : vector<16x512xf32>
    %cst_6 = arith.constant 5.000000e-01 : f32
    %10 = vector.broadcast %cst_6 : f32 to vector<16x512xf32>
    %11 = arith.mulf %10, %9 : vector<16x512xf32>
    %cst_7 = arith.constant 0.707106769 : f32
    %12 = vector.broadcast %cst_7 : f32 to vector<16x512xf32>
    %13 = arith.mulf %9, %12 : vector<16x512xf32>
    %14 = math.erf %13 : vector<16x512xf32>
    %cst_8 = arith.constant 1.000000e+00 : f32
    %15 = vector.broadcast %cst_8 : f32 to vector<16x512xf32>
    %16 = arith.addf %15, %14 : vector<16x512xf32>
    %17 = arith.mulf %11, %16 : vector<16x512xf32>
    %c0_9 = arith.constant 0 : index
    %c0_10 = arith.constant 0 : index
    %18 = vector.load %arg10[%c0_9, %c0_10] : memref<16x128xf32, #tpu.memory_space<vmem>>, vector<16x128xf32>
    %19 = arith.truncf %17 : vector<16x512xf32> to vector<16x512xbf16>
    %c0_11 = arith.constant 0 : index
    %c0_12 = arith.constant 0 : index
    %20 = vector.load %arg5[%c0_11, %c0_12] : memref<512x128xbf16, #tpu.memory_space<vmem>>, vector<512x128xbf16>
    %cst_13 = arith.constant dense<0.000000e+00> : vector<16x128xf32>
    %21 = tpu.matmul %19, %20, %cst_13 {dimension_numbers = #tpu.dot_dimension_numbers<[1], [0], [0], [1], [0, 0, 1, 1], [], []>} : vector<16x512xbf16>, vector<512x128xbf16>, vector<16x128xf32> -> vector<16x128xf32>
    %22 = arith.addf %18, %21 : vector<16x128xf32>
    %c0_14 = arith.constant 0 : index
    %c0_15 = arith.constant 0 : index
    %23 = vector.load %arg10[%c0_14, %c0_15] : memref<16x128xf32, #tpu.memory_space<vmem>>, vector<16x128xf32>
    tpu.vector_store %arg10[%c0_14, %c0_15], %22 {strides = array<i32>} : memref<16x128xf32, #tpu.memory_space<vmem>>, vector<16x128xf32>,
    %c0_i32_16 = arith.constant 0 : i32
    %24 = arith.cmpi eq, %arg1, %c0_i32_16 : i32
    %25 = arith.extui %24 : i1 to i32
    %c0_i32_17 = arith.constant 0 : i32
    %26 = arith.cmpi ne, %25, %c0_i32_17 : i32
    scf.if %26 {
      %c0_18 = arith.constant 0 : index
      %c0_19 = arith.constant 0 : index
      %27 = vector.load %arg10[%c0_18, %c0_19] : memref<16x128xf32, #tpu.memory_space<vmem>>, vector<16x128xf32>
      %c0_20 = arith.constant 0 : index
      %c0_21 = arith.constant 0 : index
      %28 = vector.load %arg6[%c0_20, %c0_21] : memref<1x128xf32, #tpu.memory_space<vmem>>, vector<1x128xf32>
      %29 = vector.broadcast %28 : vector<1x128xf32> to vector<16x128xf32>
      %30 = arith.addf %27, %29 : vector<16x128xf32>
      %c0_22 = arith.constant 0 : index
      %c0_23 = arith.constant 0 : index
      %31 = vector.load %arg2[%c0_22, %c0_23] : memref<16x128xf32, #tpu.memory_space<vmem>>, vector<16x128xf32>
      %32 = arith.addf %30, %31 : vector<16x128xf32>
      %cst_24 = arith.constant dense<0.000000e+00> : vector<16xf32>
      %33 = vector.multi_reduction <add>, %32, %cst_24 [1] : vector<16x128xf32> to vector<16xf32>
      %34 = vector.shape_cast %33 : vector<16xf32> to vector<16x1xf32>
      %cst_25 = arith.constant 1.280000e+02 : f32
      %35 = vector.broadcast %cst_25 : f32 to vector<16x1xf32>
      %36 = arith.divf %34, %35 : vector<16x1xf32>
      %37 = vector.broadcast %36 : vector<16x1xf32> to vector<16x128xf32>
      %38 = arith.subf %32, %37 : vector<16x128xf32>
      %39 = vector.broadcast %36 : vector<16x1xf32> to vector<16x128xf32>
      %40 = arith.subf %32, %39 : vector<16x128xf32>
      %41 = arith.mulf %38, %40 : vector<16x128xf32>
      %cst_26 = arith.constant dense<0.000000e+00> : vector<16xf32>
      %42 = vector.multi_reduction <add>, %41, %cst_26 [1] : vector<16x128xf32> to vector<16xf32>
      %43 = vector.shape_cast %42 : vector<16xf32> to vector<16x1xf32>
      %cst_27 = arith.constant 1.280000e+02 : f32
      %44 = vector.broadcast %cst_27 : f32 to vector<16x1xf32>
      %45 = arith.divf %43, %44 : vector<16x1xf32>
      %46 = vector.broadcast %36 : vector<16x1xf32> to vector<16x128xf32>
      %47 = arith.subf %32, %46 : vector<16x128xf32>
      %cst_28 = arith.constant 9.99999974E-6 : f32
      %48 = vector.broadcast %cst_28 : f32 to vector<16x1xf32>
      %49 = arith.addf %45, %48 : vector<16x1xf32>
      %50 = math.rsqrt %49 : vector<16x1xf32>
      %51 = vector.broadcast %50 : vector<16x1xf32> to vector<16x128xf32>
      %52 = arith.mulf %47, %51 : vector<16x128xf32>
      %c0_29 = arith.constant 0 : index
      %c0_30 = arith.constant 0 : index
      %53 = vector.load %arg7[%c0_29, %c0_30] : memref<1x128xf32, #tpu.memory_space<vmem>>, vector<1x128xf32>
      %54 = vector.broadcast %53 : vector<1x128xf32> to vector<16x128xf32>
      %55 = arith.mulf %52, %54 : vector<16x128xf32>
      %c0_31 = arith.constant 0 : index
      %c0_32 = arith.constant 0 : index
      %56 = vector.load %arg8[%c0_31, %c0_32] : memref<1x128xf32, #tpu.memory_space<vmem>>, vector<1x128xf32>
      %57 = vector.broadcast %56 : vector<1x128xf32> to vector<16x128xf32>
      %58 = arith.addf %55, %57 : vector<16x128xf32>
      %c0_33 = arith.constant 0 : index
      %c0_34 = arith.constant 0 : index
      %59 = vector.load %arg9[%c0_33, %c0_34] : memref<16x128xf32, #tpu.memory_space<vmem>>, vector<16x128xf32>
      tpu.vector_store %arg9[%c0_33, %c0_34], %58 {strides = array<i32>} : memref<16x128xf32, #tpu.memory_space<vmem>>, vector<16x128xf32>,
    } else {
    }
    return
  }
  func.func @transform_0(%arg0: i32, %arg1: i32) -> (i32, i32) {
    %c0_i32 = arith.constant 0 : i32
    %c0_i32_0 = arith.constant 0 : i32
    return %arg0, %c0_i32 : i32, i32
  }
  func.func @transform_1(%arg0: i32, %arg1: i32) -> (i32, i32) {
    %c0_i32 = arith.constant 0 : i32
    %c0_i32_0 = arith.constant 0 : i32
    return %c0_i32, %arg1 : i32, i32
  }
  func.func @transform_2(%arg0: i32, %arg1: i32) -> (i32, i32) {
    %c0_i32 = arith.constant 0 : i32
    %c0_i32_0 = arith.constant 0 : i32
    return %c0_i32, %arg1 : i32, i32
  }
  func.func @transform_3(%arg0: i32, %arg1: i32) -> (i32, i32) {
    %c0_i32 = arith.constant 0 : i32
    %c0_i32_0 = arith.constant 0 : i32
    return %arg1, %c0_i32 : i32, i32
  }
  func.func @transform_4(%arg0: i32, %arg1: i32) -> (i32, i32) {
    %c0_i32 = arith.constant 0 : i32
    %c0_i32_0 = arith.constant 0 : i32
    %c0_i32_1 = arith.constant 0 : i32
    return %c0_i32, %c0_i32_0 : i32, i32
  }
  func.func @transform_5(%arg0: i32, %arg1: i32) -> (i32, i32) {
    %c0_i32 = arith.constant 0 : i32
    %c0_i32_0 = arith.constant 0 : i32
    %c0_i32_1 = arith.constant 0 : i32
    return %c0_i32, %c0_i32_0 : i32, i32
  }
  func.func @transform_6(%arg0: i32, %arg1: i32) -> (i32, i32) {
    %c0_i32 = arith.constant 0 : i32
    %c0_i32_0 = arith.constant 0 : i32
    %c0_i32_1 = arith.constant 0 : i32
    return %c0_i32, %c0_i32_0 : i32, i32
  }
  func.func @transform_7(%arg0: i32, %arg1: i32) -> (i32, i32) {
    %c0_i32 = arith.constant 0 : i32
    %c0_i32_0 = arith.constant 0 : i32
    return %arg0, %c0_i32 : i32, i32
  }
}

module attributes {stable_mosaic.version = 11 : i64} {
  func.func @_ffn_kernel(%arg0: i32, %arg1: i32, %arg2: memref<16x128xf32, #tpu.memory_space<vmem>>, %arg3: memref<128x512xbf16, #tpu.memory_space<vmem>>, %arg4: memref<1x512xf32, #tpu.memory_space<vmem>>, %arg5: memref<512x128xbf16, #tpu.memory_space<vmem>>, %arg6: memref<1x128xf32, #tpu.memory_space<vmem>>, %arg7: memref<1x128xf32, #tpu.memory_space<vmem>>, %arg8: memref<1x128xf32, #tpu.memory_space<vmem>>, %arg9: memref<16x128xf32, #tpu.memory_space<vmem>>, %arg10: memref<16x128xf32, #tpu.memory_space<vmem>>) attributes {dimension_semantics = [#tpu.dimension_semantics<parallel>, #tpu.dimension_semantics<arbitrary>], iteration_bounds = array<i64: 1, 1>, scalar_prefetch = 0 : i64, scratch_operands = 1 : i64, tpu.core_type = #tpu.core_type<tc>, window_params = [{transform_indices = @transform_0, window_bounds = array<i64: 16, 128>}, {transform_indices = @transform_1, window_bounds = array<i64: 128, 512>}, {transform_indices = @transform_2, window_bounds = array<i64: 1, 512>}, {transform_indices = @transform_3, window_bounds = array<i64: 512, 128>}, {pipeline_mode = #tpu.pipeline_mode<synchronous>, transform_indices = @transform_4, window_bounds = array<i64: 1, 128>}, {pipeline_mode = #tpu.pipeline_mode<synchronous>, transform_indices = @transform_5, window_bounds = array<i64: 1, 128>}, {pipeline_mode = #tpu.pipeline_mode<synchronous>, transform_indices = @transform_6, window_bounds = array<i64: 1, 128>}, {transform_indices = @transform_7, window_bounds = array<i64: 16, 128>}]} {
    %c0_i32 = arith.constant 0 : i32
    %0 = arith.cmpi eq, %arg1, %c0_i32 : i32
    %1 = arith.extui %0 : i1 to i32
    %c0_i32_0 = arith.constant 0 : i32
    %2 = arith.cmpi ne, %1, %c0_i32_0 : i32
    scf.if %2 {
      %cst_18 = arith.constant 0.000000e+00 : f32
      %27 = vector.broadcast %cst_18 : f32 to vector<16x128xf32>
      %c0_19 = arith.constant 0 : index
      %c0_20 = arith.constant 0 : index
      %28 = vector.load %arg10[%c0_19, %c0_20] : memref<16x128xf32, #tpu.memory_space<vmem>>, vector<16x128xf32>
      tpu.vector_store %arg10[%c0_19, %c0_20], %27 {strides = array<i32>} : memref<16x128xf32, #tpu.memory_space<vmem>>, vector<16x128xf32>,
    } else {
    }
    %c0 = arith.constant 0 : index
    %c0_1 = arith.constant 0 : index
    %3 = vector.load %arg2[%c0, %c0_1] : memref<16x128xf32, #tpu.memory_space<vmem>>, vector<16x128xf32>
    %4 = arith.truncf %3 : vector<16x128xf32> to vector<16x128xbf16>
    %c0_2 = arith.constant 0 : index
    %c0_3 = arith.constant 0 : index
    %5 = vector.load %arg3[%c0_2, %c0_3] : memref<128x512xbf16, #tpu.memory_space<vmem>>, vector<128x512xbf16>
    %cst = arith.constant dense<0.000000e+00> : vector<16x512xf32>
    %6 = tpu.matmul %4, %5, %cst {dimension_numbers = #tpu.dot_dimension_numbers<[1], [0], [0], [1], [0, 0, 1, 1], [], []>} : vector<16x128xbf16>, vector<128x512xbf16>, vector<16x512xf32> -> vector<16x512xf32>
    %c0_4 = arith.constant 0 : index
    %c0_5 = arith.constant 0 : index
    %7 = vector.load %arg4[%c0_4, %c0_5] : memref<1x512xf32, #tpu.memory_space<vmem>>, vector<1x512xf32>
    %8 = vector.broadcast %7 : vector<1x512xf32> to vector<16x512xf32>
    %9 = arith.addf %6, %8 : vector<16x512xf32>
    %cst_6 = arith.constant 5.000000e-01 : f32
    %10 = vector.broadcast %cst_6 : f32 to vector<16x512xf32>
    %11 = arith.mulf %10, %9 : vector<16x512xf32>
    %cst_7 = arith.constant 0.707106769 : f32
    %12 = vector.broadcast %cst_7 : f32 to vector<16x512xf32>
    %13 = arith.mulf %9, %12 : vector<16x512xf32>
    %14 = math.erf %13 : vector<16x512xf32>
    %cst_8 = arith.constant 1.000000e+00 : f32
    %15 = vector.broadcast %cst_8 : f32 to vector<16x512xf32>
    %16 = arith.addf %15, %14 : vector<16x512xf32>
    %17 = arith.mulf %11, %16 : vector<16x512xf32>
    %c0_9 = arith.constant 0 : index
    %c0_10 = arith.constant 0 : index
    %18 = vector.load %arg10[%c0_9, %c0_10] : memref<16x128xf32, #tpu.memory_space<vmem>>, vector<16x128xf32>
    %19 = arith.truncf %17 : vector<16x512xf32> to vector<16x512xbf16>
    %c0_11 = arith.constant 0 : index
    %c0_12 = arith.constant 0 : index
    %20 = vector.load %arg5[%c0_11, %c0_12] : memref<512x128xbf16, #tpu.memory_space<vmem>>, vector<512x128xbf16>
    %cst_13 = arith.constant dense<0.000000e+00> : vector<16x128xf32>
    %21 = tpu.matmul %19, %20, %cst_13 {dimension_numbers = #tpu.dot_dimension_numbers<[1], [0], [0], [1], [0, 0, 1, 1], [], []>} : vector<16x512xbf16>, vector<512x128xbf16>, vector<16x128xf32> -> vector<16x128xf32>
    %22 = arith.addf %18, %21 : vector<16x128xf32>
    %c0_14 = arith.constant 0 : index
    %c0_15 = arith.constant 0 : index
    %23 = vector.load %arg10[%c0_14, %c0_15] : memref<16x128xf32, #tpu.memory_space<vmem>>, vector<16x128xf32>
    tpu.vector_store %arg10[%c0_14, %c0_15], %22 {strides = array<i32>} : memref<16x128xf32, #tpu.memory_space<vmem>>, vector<16x128xf32>,
    %c0_i32_16 = arith.constant 0 : i32
    %24 = arith.cmpi eq, %arg1, %c0_i32_16 : i32
    %25 = arith.extui %24 : i1 to i32
    %c0_i32_17 = arith.constant 0 : i32
    %26 = arith.cmpi ne, %25, %c0_i32_17 : i32
    scf.if %26 {
      %c0_18 = arith.constant 0 : index
      %c0_19 = arith.constant 0 : index
      %27 = vector.load %arg10[%c0_18, %c0_19] : memref<16x128xf32, #tpu.memory_space<vmem>>, vector<16x128xf32>
      %c0_20 = arith.constant 0 : index
      %c0_21 = arith.constant 0 : index
      %28 = vector.load %arg6[%c0_20, %c0_21] : memref<1x128xf32, #tpu.memory_space<vmem>>, vector<1x128xf32>
      %29 = vector.broadcast %28 : vector<1x128xf32> to vector<16x128xf32>
      %30 = arith.addf %27, %29 : vector<16x128xf32>
      %c0_22 = arith.constant 0 : index
      %c0_23 = arith.constant 0 : index
      %31 = vector.load %arg2[%c0_22, %c0_23] : memref<16x128xf32, #tpu.memory_space<vmem>>, vector<16x128xf32>
      %32 = arith.addf %30, %31 : vector<16x128xf32>
      %cst_24 = arith.constant dense<0.000000e+00> : vector<16xf32>
      %33 = vector.multi_reduction <add>, %32, %cst_24 [1] : vector<16x128xf32> to vector<16xf32>
      %34 = vector.shape_cast %33 : vector<16xf32> to vector<16x1xf32>
      %cst_25 = arith.constant 1.280000e+02 : f32
      %35 = vector.broadcast %cst_25 : f32 to vector<16x1xf32>
      %36 = arith.divf %34, %35 : vector<16x1xf32>
      %37 = vector.broadcast %36 : vector<16x1xf32> to vector<16x128xf32>
      %38 = arith.subf %32, %37 : vector<16x128xf32>
      %39 = vector.broadcast %36 : vector<16x1xf32> to vector<16x128xf32>
      %40 = arith.subf %32, %39 : vector<16x128xf32>
      %41 = arith.mulf %38, %40 : vector<16x128xf32>
      %cst_26 = arith.constant dense<0.000000e+00> : vector<16xf32>
      %42 = vector.multi_reduction <add>, %41, %cst_26 [1] : vector<16x128xf32> to vector<16xf32>
      %43 = vector.shape_cast %42 : vector<16xf32> to vector<16x1xf32>
      %cst_27 = arith.constant 1.280000e+02 : f32
      %44 = vector.broadcast %cst_27 : f32 to vector<16x1xf32>
      %45 = arith.divf %43, %44 : vector<16x1xf32>
      %46 = vector.broadcast %36 : vector<16x1xf32> to vector<16x128xf32>
      %47 = arith.subf %32, %46 : vector<16x128xf32>
      %cst_28 = arith.constant 9.99999974E-6 : f32
      %48 = vector.broadcast %cst_28 : f32 to vector<16x1xf32>
      %49 = arith.addf %45, %48 : vector<16x1xf32>
      %50 = math.rsqrt %49 : vector<16x1xf32>
      %51 = vector.broadcast %50 : vector<16x1xf32> to vector<16x128xf32>
      %52 = arith.mulf %47, %51 : vector<16x128xf32>
      %c0_29 = arith.constant 0 : index
      %c0_30 = arith.constant 0 : index
      %53 = vector.load %arg7[%c0_29, %c0_30] : memref<1x128xf32, #tpu.memory_space<vmem>>, vector<1x128xf32>
      %54 = vector.broadcast %53 : vector<1x128xf32> to vector<16x128xf32>
      %55 = arith.mulf %52, %54 : vector<16x128xf32>
      %c0_31 = arith.constant 0 : index
      %c0_32 = arith.constant 0 : index
      %56 = vector.load %arg8[%c0_31, %c0_32] : memref<1x128xf32, #tpu.memory_space<vmem>>, vector<1x128xf32>
      %57 = vector.broadcast %56 : vector<1x128xf32> to vector<16x128xf32>
      %58 = arith.addf %55, %57 : vector<16x128xf32>
      %c0_33 = arith.constant 0 : index
      %c0_34 = arith.constant 0 : index
      %59 = vector.load %arg9[%c0_33, %c0_34] : memref<16x128xf32, #tpu.memory_space<vmem>>, vector<16x128xf32>
      tpu.vector_store %arg9[%c0_33, %c0_34], %58 {strides = array<i32>} : memref<16x128xf32, #tpu.memory_space<vmem>>, vector<16x128xf32>,
    } else {
    }
    return
  }
  func.func @transform_0(%arg0: i32, %arg1: i32) -> (i32, i32) {
    %c0_i32 = arith.constant 0 : i32
    %c0_i32_0 = arith.constant 0 : i32
    return %arg0, %c0_i32 : i32, i32
  }
  func.func @transform_1(%arg0: i32, %arg1: i32) -> (i32, i32) {
    %c0_i32 = arith.constant 0 : i32
    %c0_i32_0 = arith.constant 0 : i32
    return %c0_i32, %arg1 : i32, i32
  }
  func.func @transform_2(%arg0: i32, %arg1: i32) -> (i32, i32) {
    %c0_i32 = arith.constant 0 : i32
    %c0_i32_0 = arith.constant 0 : i32
    return %c0_i32, %arg1 : i32, i32
  }
  func.func @transform_3(%arg0: i32, %arg1: i32) -> (i32, i32) {
    %c0_i32 = arith.constant 0 : i32
    %c0_i32_0 = arith.constant 0 : i32
    return %arg1, %c0_i32 : i32, i32
  }
  func.func @transform_4(%arg0: i32, %arg1: i32) -> (i32, i32) {
    %c0_i32 = arith.constant 0 : i32
    %c0_i32_0 = arith.constant 0 : i32
    %c0_i32_1 = arith.constant 0 : i32
    return %c0_i32, %c0_i32_0 : i32, i32
  }
  func.func @transform_5(%arg0: i32, %arg1: i32) -> (i32, i32) {
    %c0_i32 = arith.constant 0 : i32
    %c0_i32_0 = arith.constant 0 : i32
    %c0_i32_1 = arith.constant 0 : i32
    return %c0_i32, %c0_i32_0 : i32, i32
  }
  func.func @transform_6(%arg0: i32, %arg1: i32) -> (i32, i32) {
    %c0_i32 = arith.constant 0 : i32
    %c0_i32_0 = arith.constant 0 : i32
    %c0_i32_1 = arith.constant 0 : i32
    return %c0_i32, %c0_i32_0 : i32, i32
  }
  func.func @transform_7(%arg0: i32, %arg1: i32) -> (i32, i32) {
    %c0_i32 = arith.constant 0 : i32
    %c0_i32_0 = arith.constant 0 : i32
    return %arg0, %c0_i32 : i32, i32
  }
}

</mosaic_0001>

<llo_original>
// kernel: tpu_custom_call.1
$region0: #{tpu_custom_call.1}
  #allocation0 [shape = 'u32[]', space=smem, size = 0x4, offset = 0x4, fixed_abs, tag = 'smem constant byte address 0x4 - core index']
  #allocation1 [shape = 'u32[144,128]{1,0:T(1,128)}', space=vmem, size = 0x12000, scoped, tag = 'internal scratch']
  #allocation2 [shape = 'f32[16,128]{1,0:T(8,128)}', space=vmem, size = 0x2000, scoped, tag = 'scratch operand']
  %s0 = inlined_call_operand.hbm [shape: f32[16,128], index: 0, kind: input, shape index: {}]
  %s1 = inlined_call_operand.hbm [shape: bf16[128,512], index: 1, kind: input, shape index: {}]
  %s2 = inlined_call_operand.hbm [shape: f32[1,512], index: 2, kind: input, shape index: {}]
  %s3 = inlined_call_operand.hbm [shape: bf16[512,128], index: 3, kind: input, shape index: {}]
  %s4 = inlined_call_operand.vmem [shape: f32[1,128], index: 4, kind: input, shape index: {}]
  %s5 = inlined_call_operand.vmem [shape: f32[1,128], index: 5, kind: input, shape index: {}]
  %s6 = inlined_call_operand.vmem [shape: f32[1,128], index: 6, kind: input, shape index: {}]
  %s7 = inlined_call_operand.hbm [shape: f32[16,128], index: 7, kind: output, shape index: {}]
  %s8 = sld [smem:[#allocation0]]
  $region62: #{tpu_custom_call.1} parent=0
    _
  %s10 = ssub.s32 1, %s8
  %s11 = scalar_select 0, %s10, %s8
  $region1: #{tpu_custom_call.1} parent=0
    #allocation3 [shape = 'u8[8192]{0}', space=vmem, size = 0x2000, scoped, tag = 'input window, operand 0, single buffered']
    #allocation4 [shape = 's32[1]{0}', space=sflag, size = 0x4, scoped, tag = 'scoped memory for tpu_custom_call.1']
    #allocation5 [shape = 's32[1]{0}', space=sflag, size = 0x4, scoped, tag = 'scoped memory for tpu_custom_call.1']
    #allocation6 [shape = 'u8[131072]{0}', space=vmem, size = 0x20000, scoped, tag = 'input window, operand 1, single buffered']
    #allocation7 [shape = 's32[1]{0}', space=sflag, size = 0x4, scoped, tag = 'scoped memory for tpu_custom_call.1']
    #allocation8 [shape = 'u8[2048]{0}', space=vmem, size = 0x800, scoped, tag = 'input window, operand 2, single buffered']
    #allocation9 [shape = 'u8[131072]{0}', space=vmem, size = 0x20000, scoped, tag = 'input window, operand 3, single buffered']
    #allocation10 [shape = 's32[1]{0}', space=sflag, size = 0x4, scoped, tag = 'scoped memory for tpu_custom_call.1']
    #allocation11 [shape = 'u8[8192]{0}', space=vmem, size = 0x2000, scoped, tag = 'output window, operand 0, single buffered']
    %12 = vsyncpa [#allocation4], 0
    %13 = vsyncpa [#allocation7], 0
    %14 = vsyncpa [#allocation10], 0
    %15 = vsyncpa [#allocation5], 0
    // Predicated region
    $region2: #{tpu_custom_call.1} parent=1 // pred_check
      _
    $region3: #{tpu_custom_call.1} parent=1 // pred_check_branch
      %17 = sbr.rel (0) target = $region5
    $region4: #{tpu_custom_call.1} parent=1 // pred_region
      %s19 = ssub.s32 256, 256
      %20 = vsyncadd [#allocation4], %s19
      %s21 = sshll.u32 [#allocation3], 4
      %s22 = int_to_ptr.vmem [resolvable:$true] %s21
      %27 = dma.hbm_to_vmem [thread:$0]  %s0, 256, %s22, [#allocation4], 128, 128, 8
    $region5: #{tpu_custom_call.1} parent=1 // pred_fallthru
      _
    // Predicated region
    $region6: #{tpu_custom_call.1} parent=1 // pred_check
      _
    $region7: #{tpu_custom_call.1} parent=1 // pred_check_branch
      %29 = sbr.rel (0) target = $region9
    $region8: #{tpu_custom_call.1} parent=1 // pred_region
      %s31 = ssub.s32 4096, 4096
      %32 = vsyncadd [#allocation7], %s31
      %s33 = sshll.u32 [#allocation6], 4
      %s34 = int_to_ptr.vmem [resolvable:$true] %s33
      %39 = dma.hbm_to_vmem [thread:$0]  %s1, 4096, %s34, [#allocation7], 256, 256, 16
    $region9: #{tpu_custom_call.1} parent=1 // pred_fallthru
      _
    // Predicated region
    $region10: #{tpu_custom_call.1} parent=1 // pred_check
      _
    $region11: #{tpu_custom_call.1} parent=1 // pred_check_branch
      %41 = sbr.rel (0) target = $region13
    $region12: #{tpu_custom_call.1} parent=1 // pred_region
      %s43 = ssub.s32 64, 64
      %44 = vsyncadd [#allocation7], %s43
      %s46 = sshll.u32 [#allocation8], 4
      %s47 = int_to_ptr.vmem [resolvable:$true] %s46
      %49 = dma.hbm_to_vmem [thread:$0]  %s2, 64, %s47, [#allocation7]
    $region13: #{tpu_custom_call.1} parent=1 // pred_fallthru
      _
    // Predicated region
    $region14: #{tpu_custom_call.1} parent=1 // pred_check
      _
    $region15: #{tpu_custom_call.1} parent=1 // pred_check_branch
      %51 = sbr.rel (0) target = $region17
    $region16: #{tpu_custom_call.1} parent=1 // pred_region
      %s53 = ssub.s32 4096, 4096
      %54 = vsyncadd [#allocation10], %s53
      %s55 = sshll.u32 [#allocation9], 4
      %s56 = int_to_ptr.vmem [resolvable:$true] %s55
      %61 = dma.hbm_to_vmem [thread:$0]  %s3, 4096, %s56, [#allocation10], 64, 64, 4
    $region17: #{tpu_custom_call.1} parent=1 // pred_fallthru
      _
    // Predicated region
    $region18: #{tpu_custom_call.1} parent=1 // pred_check
      _
    $region19: #{tpu_custom_call.1} parent=1 // pred_check_branch
      %63 = sbr.rel (0) target = $region21
    $region20: #{tpu_custom_call.1} parent=1 // pred_region
      _
    $region21: #{tpu_custom_call.1} parent=1 // pred_fallthru
      _
    // Predicated region
    $region22: #{tpu_custom_call.1} parent=1 // pred_check
      _
    $region23: #{tpu_custom_call.1} parent=1 // pred_check_branch
      %65 = sbr.rel (0) target = $region25
    $region24: #{tpu_custom_call.1} parent=1 // pred_region
      _
    $region25: #{tpu_custom_call.1} parent=1 // pred_fallthru
      _
    // Predicated region
    $region26: #{tpu_custom_call.1} parent=1 // pred_check
      _
    $region27: #{tpu_custom_call.1} parent=1 // pred_check_branch
      %67 = sbr.rel (0) target = $region29
    $region28: #{tpu_custom_call.1} parent=1 // pred_region
      _
    $region29: #{tpu_custom_call.1} parent=1 // pred_fallthru
      _
    // Predicated region
    $region30: #{tpu_custom_call.1} parent=1 // pred_check
      _
    $region31: #{tpu_custom_call.1} parent=1 // pred_check_branch
      %69 = sbr.rel (0) target = $region33
    $region32: #{tpu_custom_call.1} parent=1 // pred_region
      %70 = dma.done [#allocation4], 256
    $region33: #{tpu_custom_call.1} parent=1 // pred_fallthru
      _
    // Predicated region
    $region34: #{tpu_custom_call.1} parent=1 // pred_check
      _
    $region35: #{tpu_custom_call.1} parent=1 // pred_check_branch
      %72 = sbr.rel (0) target = $region37
    $region36: #{tpu_custom_call.1} parent=1 // pred_region
      %73 = dma.done [#allocation7], 4096
    $region37: #{tpu_custom_call.1} parent=1 // pred_fallthru
      _
    // Predicated region
    $region38: #{tpu_custom_call.1} parent=1 // pred_check
      _
    $region39: #{tpu_custom_call.1} parent=1 // pred_check_branch
      %75 = sbr.rel (0) target = $region41
    $region40: #{tpu_custom_call.1} parent=1 // pred_region
      %76 = dma.done [#allocation7], 64
    $region41: #{tpu_custom_call.1} parent=1 // pred_fallthru
      _
    // Predicated region
    $region42: #{tpu_custom_call.1} parent=1 // pred_check
      _
    $region43: #{tpu_custom_call.1} parent=1 // pred_check_branch
      %78 = sbr.rel (0) target = $region45
    $region44: #{tpu_custom_call.1} parent=1 // pred_region
      %79 = dma.done [#allocation10], 4096
    $region45: #{tpu_custom_call.1} parent=1 // pred_fallthru
      _
    %p81 = scmp.eq.s32.totalorder 0, 0
    // Predicated region
    $region46: #{tpu_custom_call.1} parent=1 // pred_check
      %p82 = pneg %p81
    $region47: #{tpu_custom_call.1} parent=1 // pred_check_branch
      %84 = sbr.rel (%p82) target = $region49
    $region48: #{tpu_custom_call.1} parent=1 // pred_region
      %85 = vst [vmem:[#allocation2] sm:$0xff] 0.0
      %86 = vst [vmem:[#allocation2 + $0x8] sm:$0xff] 0.0
    $region49: #{tpu_custom_call.1} parent=1 // pred_fallthru
      _
    %v87 = vld [vmem:[#allocation3] sm:$0xff]
    %v88 = vld [vmem:[#allocation3 + $0x8] sm:$0xff]
    %v89 = vpack.c.bf16 %v88, %v87
    %v90 = vld [vmem:[#allocation6] sm:$0xff]
    %v91 = vld [vmem:[#allocation6 + $0x8] sm:$0xff]
    %v92 = vld [vmem:[#allocation6 + $0x10] sm:$0xff]
    %v93 = vld [vmem:[#allocation6 + $0x18] sm:$0xff]
    %v94 = vld [vmem:[#allocation6 + $0x20] sm:$0xff]
    %v95 = vld [vmem:[#allocation6 + $0x28] sm:$0xff]
    %v96 = vld [vmem:[#allocation6 + $0x30] sm:$0xff]
    %v97 = vld [vmem:[#allocation6 + $0x38] sm:$0xff]
    %v98 = vld [vmem:[#allocation6 + $0x40] sm:$0xff]
    %v99 = vld [vmem:[#allocation6 + $0x48] sm:$0xff]
    %v100 = vld [vmem:[#allocation6 + $0x50] sm:$0xff]
    %v101 = vld [vmem:[#allocation6 + $0x58] sm:$0xff]
    %v102 = vld [vmem:[#allocation6 + $0x60] sm:$0xff]
    %v103 = vld [vmem:[#allocation6 + $0x68] sm:$0xff]
    %v104 = vld [vmem:[#allocation6 + $0x70] sm:$0xff]
    %v105 = vld [vmem:[#allocation6 + $0x78] sm:$0xff]
    %v106 = vld [vmem:[#allocation6 + $0x80] sm:$0xff]
    %v107 = vld [vmem:[#allocation6 + $0x88] sm:$0xff]
    %v108 = vld [vmem:[#allocation6 + $0x90] sm:$0xff]
    %v109 = vld [vmem:[#allocation6 + $0x98] sm:$0xff]
    %v110 = vld [vmem:[#allocation6 + $0xa0] sm:$0xff]
    %v111 = vld [vmem:[#allocation6 + $0xa8] sm:$0xff]
    %v112 = vld [vmem:[#allocation6 + $0xb0] sm:$0xff]
    %v113 = vld [vmem:[#allocation6 + $0xb8] sm:$0xff]
    %v114 = vld [vmem:[#allocation6 + $0xc0] sm:$0xff]
    %v115 = vld [vmem:[#allocation6 + $0xc8] sm:$0xff]
    %v116 = vld [vmem:[#allocation6 + $0xd0] sm:$0xff]
    %v117 = vld [vmem:[#allocation6 + $0xd8] sm:$0xff]
    %v118 = vld [vmem:[#allocation6 + $0xe0] sm:$0xff]
    %v119 = vld [vmem:[#allocation6 + $0xe8] sm:$0xff]
    %v120 = vld [vmem:[#allocation6 + $0xf0] sm:$0xff]
    %v121 = vld [vmem:[#allocation6 + $0xf8] sm:$0xff]
    %v122 = vld [vmem:[#allocation8] sm:$0xf]
    %v124 = vlaneseq
    %v125 = vshrl.u32 %v124, 7
    %v126 = vsub.s32 0, %v125
    %v127 = vrot.slane %v122, %v126
    %v128 = vlaneseq
    %v129 = vshrl.u32 %v128, 7
    %v130 = vsub.s32 1, %v129
    %v131 = vrot.slane %v122, %v130
    %v132 = vlaneseq
    %v133 = vshrl.u32 %v132, 7
    %v134 = vsub.s32 2, %v133
    %v135 = vrot.slane %v122, %v134
    %v136 = vlaneseq
    %v137 = vshrl.u32 %v136, 7
    %v138 = vsub.s32 3, %v137
    %v139 = vrot.slane %v122, %v138
    %v176 = vunpack.c.l.b16 %v90
    %v177 = vunpack.c.h.b16 %v90
    %v178 = vunpack.c.l.b16 %v91
    %v179 = vunpack.c.h.b16 %v91
    %v180 = vunpack.c.l.b16 %v92
    %v181 = vunpack.c.h.b16 %v92
    %v182 = vunpack.c.l.b16 %v93
    %v183 = vunpack.c.h.b16 %v93
    %v184 = vunpack.c.l.b16 %v94
    %v185 = vunpack.c.h.b16 %v94
    %v186 = vunpack.c.l.b16 %v95
    %v187 = vunpack.c.h.b16 %v95
    %v188 = vunpack.c.l.b16 %v96
    %v189 = vunpack.c.h.b16 %v96
    %v190 = vunpack.c.l.b16 %v97
    %v191 = vunpack.c.h.b16 %v97
    %v192 = vunpack.c.l.b16 %v98
    %v193 = vunpack.c.h.b16 %v98
    %v194 = vunpack.c.l.b16 %v99
    %v195 = vunpack.c.h.b16 %v99
    %v196 = vunpack.c.l.b16 %v100
    %v197 = vunpack.c.h.b16 %v100
    %v198 = vunpack.c.l.b16 %v101
    %v199 = vunpack.c.h.b16 %v101
    %v200 = vunpack.c.l.b16 %v102
    %v201 = vunpack.c.h.b16 %v102
    %v202 = vunpack.c.l.b16 %v103
    %v203 = vunpack.c.h.b16 %v103
    %v204 = vunpack.c.l.b16 %v104
    %v205 = vunpack.c.h.b16 %v104
    %v206 = vunpack.c.l.b16 %v105
    %v207 = vunpack.c.h.b16 %v105
    %v208 = vunpack.c.l.b16 %v106
    %v209 = vunpack.c.h.b16 %v106
    %v210 = vunpack.c.l.b16 %v107
    %v211 = vunpack.c.h.b16 %v107
    %v212 = vunpack.c.l.b16 %v108
    %v213 = vunpack.c.h.b16 %v108
    %v214 = vunpack.c.l.b16 %v109
    %v215 = vunpack.c.h.b16 %v109
    %v216 = vunpack.c.l.b16 %v110
    %v217 = vunpack.c.h.b16 %v110
    %v218 = vunpack.c.l.b16 %v111
    %v219 = vunpack.c.h.b16 %v111
    %v220 = vunpack.c.l.b16 %v112
    %v221 = vunpack.c.h.b16 %v112
    %v222 = vunpack.c.l.b16 %v113
    %v223 = vunpack.c.h.b16 %v113
    %v224 = vunpack.c.l.b16 %v114
    %v225 = vunpack.c.h.b16 %v114
    %v226 = vunpack.c.l.b16 %v115
    %v227 = vunpack.c.h.b16 %v115
    %v228 = vunpack.c.l.b16 %v116
    %v229 = vunpack.c.h.b16 %v116
    %v230 = vunpack.c.l.b16 %v117
    %v231 = vunpack.c.h.b16 %v117
    %v232 = vunpack.c.l.b16 %v118
    %v233 = vunpack.c.h.b16 %v118
    %v234 = vunpack.c.l.b16 %v119
    %v235 = vunpack.c.h.b16 %v119
    %v236 = vunpack.c.l.b16 %v120
    %v237 = vunpack.c.h.b16 %v120
    %v238 = vunpack.c.l.b16 %v121
    %v239 = vunpack.c.h.b16 %v121
    %v240 = vpack.c.b16 %v180, %v176
    %v241 = vpack.c.b16 %v181, %v177
    %v242 = vpack.c.b16 %v182, %v178
    %v243 = vpack.c.b16 %v183, %v179
    %v244 = vpack.c.b16 %v188, %v184
    %v245 = vpack.c.b16 %v189, %v185
    %v246 = vpack.c.b16 %v190, %v186
    %v247 = vpack.c.b16 %v191, %v187
    %v248 = vpack.c.b16 %v196, %v192
    %v249 = vpack.c.b16 %v197, %v193
    %v250 = vpack.c.b16 %v198, %v194
    %v251 = vpack.c.b16 %v199, %v195
    %v252 = vpack.c.b16 %v204, %v200
    %v253 = vpack.c.b16 %v205, %v201
    %v254 = vpack.c.b16 %v206, %v202
    %v255 = vpack.c.b16 %v207, %v203
    %v256 = vpack.c.b16 %v212, %v208
    %v257 = vpack.c.b16 %v213, %v209
    %v258 = vpack.c.b16 %v214, %v210
    %v259 = vpack.c.b16 %v215, %v211
    %v260 = vpack.c.b16 %v220, %v216
    %v261 = vpack.c.b16 %v221, %v217
    %v262 = vpack.c.b16 %v222, %v218
    %v263 = vpack.c.b16 %v223, %v219
    %v264 = vpack.c.b16 %v228, %v224
    %v265 = vpack.c.b16 %v229, %v225
    %v266 = vpack.c.b16 %v230, %v226
    %v267 = vpack.c.b16 %v231, %v227
    %v268 = vpack.c.b16 %v236, %v232
    %v269 = vpack.c.b16 %v237, %v233
    %v270 = vpack.c.b16 %v238, %v234
    %v271 = vpack.c.b16 %v239, %v235
    %304 = vmatprep.subr.bf16.mxu0 %v269
    %305 = vmatpush1.bf16.msra.mxu0 %v268
    %306 = vmatprep.subr.bf16.mxu0 %v265
    %307 = vmatpush1.bf16.msra.mxu0 %v264
    %308 = vmatprep.subr.bf16.mxu0 %v261
    %309 = vmatpush1.bf16.msra.mxu0 %v260
    %310 = vmatprep.subr.bf16.mxu0 %v257
    %311 = vmatpush1.bf16.msra.mxu0 %v256
    %312 = vmatprep.subr.bf16.mxu0 %v253
    %313 = vmatpush1.bf16.msra.mxu0 %v252
    %314 = vmatprep.subr.bf16.mxu0 %v249
    %315 = vmatpush1.bf16.msra.mxu0 %v248
    %316 = vmatprep.subr.bf16.mxu0 %v245
    %317 = vmatpush1.bf16.msra.mxu0 %v244
    %318 = vmatprep.subr.bf16.mxu0 %v241
    %319 = vmatpush1.bf16.msra.mxu0 %v240
    %320 = vmatprep.subr.bf16.mxu0 0
    %321 = vmatpush2.bf16.msra.mxu0 0
    %322 = vmatprep.subr.bf16.mxu0 0
    %323 = vmatpush2.bf16.msra.mxu0 0
    %324 = vmatprep.subr.bf16.mxu0 0
    %325 = vmatpush2.bf16.msra.mxu0 0
    %326 = vmatprep.subr.bf16.mxu0 0
    %327 = vmatpush2.bf16.msra.mxu0 0
    %328 = vmatprep.subr.bf16.mxu0 0
    %329 = vmatpush2.bf16.msra.mxu0 0
    %330 = vmatprep.subr.bf16.mxu0 0
    %331 = vmatpush2.bf16.msra.mxu0 0
    %332 = vmatprep.subr.bf16.mxu0 0
    %333 = vmatpush2.bf16.msra.mxu0 0
    %334 = vmatprep.subr.bf16.mxu0 0
    %335 = vmatpush2.bf16.msra.mxu0 0
    %336 = vmatprep.mubr.bf16.mxu0 0
    %337 = vmatmul.mubr.bf16.gmra.mxu0 %v89
    %v338 = vpop.f32.mrf.mxu0
    %v339 = vadd.f32 %v127, %v338
    %v340 = vpop.f32.mrf.mxu0
    %v341 = vadd.f32 %v131, %v340
    %v342 = vpop.f32.mrf.mxu0
    %v343 = vadd.f32 %v127, %v342
    %v344 = vpop.f32.mrf.mxu0
    %v345 = vadd.f32 %v131, %v344
    %346 = vdwg.mxu0
    %347 = vmatprep.subr.bf16.mxu0 %v271
    %348 = vmatpush1.bf16.msra.mxu0 %v270
    %349 = vmatprep.subr.bf16.mxu0 %v267
    %350 = vmatpush1.bf16.msra.mxu0 %v266
    %351 = vmatprep.subr.bf16.mxu0 %v263
    %352 = vmatpush1.bf16.msra.mxu0 %v262
    %353 = vmatprep.subr.bf16.mxu0 %v259
    %354 = vmatpush1.bf16.msra.mxu0 %v258
    %355 = vmatprep.subr.bf16.mxu0 %v255
    %356 = vmatpush1.bf16.msra.mxu0 %v254
    %357 = vmatprep.subr.bf16.mxu0 %v251
    %358 = vmatpush1.bf16.msra.mxu0 %v250
    %359 = vmatprep.subr.bf16.mxu0 %v247
    %360 = vmatpush1.bf16.msra.mxu0 %v246
    %361 = vmatprep.subr.bf16.mxu0 %v243
    %362 = vmatpush1.bf16.msra.mxu0 %v242
    %363 = vmatprep.subr.bf16.mxu0 0
    %364 = vmatpush2.bf16.msra.mxu0 0
    %365 = vmatprep.subr.bf16.mxu0 0
    %366 = vmatpush2.bf16.msra.mxu0 0
    %367 = vmatprep.subr.bf16.mxu0 0
    %368 = vmatpush2.bf16.msra.mxu0 0
    %369 = vmatprep.subr.bf16.mxu0 0
    %370 = vmatpush2.bf16.msra.mxu0 0
    %371 = vmatprep.subr.bf16.mxu0 0
    %372 = vmatpush2.bf16.msra.mxu0 0
    %373 = vmatprep.subr.bf16.mxu0 0
    %374 = vmatpush2.bf16.msra.mxu0 0
    %375 = vmatprep.subr.bf16.mxu0 0
    %376 = vmatpush2.bf16.msra.mxu0 0
    %377 = vmatprep.subr.bf16.mxu0 0
    %378 = vmatpush2.bf16.msra.mxu0 0
    %379 = vmatprep.mubr.bf16.mxu0 0
    %380 = vmatmul.mubr.bf16.gmra.mxu0 %v89
    %v381 = vpop.f32.mrf.mxu0
    %v382 = vadd.f32 %v135, %v381
    %v383 = vpop.f32.mrf.mxu0
    %v384 = vadd.f32 %v139, %v383
    %v385 = vpop.f32.mrf.mxu0
    %v386 = vadd.f32 %v135, %v385
    %v387 = vpop.f32.mrf.mxu0
    %v388 = vadd.f32 %v139, %v387
    %389 = vdwg.mxu0
    %v390 = vmul.f32 %v339, 0.5
    %v391 = vmul.f32 %v341, 0.5
    %v392 = vmul.f32 %v382, 0.5
    %v393 = vmul.f32 %v384, 0.5
    %v394 = vmul.f32 %v343, 0.5
    %v395 = vmul.f32 %v345, 0.5
    %v396 = vmul.f32 %v386, 0.5
    %v397 = vmul.f32 %v388, 0.5
    %v398 = vmul.f32 %v339, 0.70710677
    %v399 = vmul.f32 %v341, 0.70710677
    %v400 = vmul.f32 %v382, 0.70710677
    %v401 = vmul.f32 %v384, 0.70710677
    %v402 = vmul.f32 %v343, 0.70710677
    %v403 = vmul.f32 %v345, 0.70710677
    %v404 = vmul.f32 %v386, 0.70710677
    %v405 = vmul.f32 %v388, 0.70710677
    %v406 = verf.f32.pop %v398
    %v407 = verf.f32.pop %v399
    %v408 = verf.f32.pop %v400
    %v409 = verf.f32.pop %v401
    %v410 = verf.f32.pop %v402
    %v411 = verf.f32.pop %v403
    %v412 = verf.f32.pop %v404
    %v413 = verf.f32.pop %v405
    %v414 = vadd.f32 %v406, 1.0
    %v415 = vadd.f32 %v407, 1.0
    %v416 = vadd.f32 %v408, 1.0
    %v417 = vadd.f32 %v409, 1.0
    %v418 = vadd.f32 %v410, 1.0
    %v419 = vadd.f32 %v411, 1.0
    %v420 = vadd.f32 %v412, 1.0
    %v421 = vadd.f32 %v413, 1.0
    %v422 = vmul.f32 %v390, %v414
    %v423 = vmul.f32 %v391, %v415
    %v424 = vmul.f32 %v392, %v416
    %v425 = vmul.f32 %v393, %v417
    %v426 = vmul.f32 %v394, %v418
    %v427 = vmul.f32 %v395, %v419
    %v428 = vmul.f32 %v396, %v420
    %v429 = vmul.f32 %v397, %v421
    %v430 = vld [vmem:[#allocation2] sm:$0xff]
    %v431 = vld [vmem:[#allocation2 + $0x8] sm:$0xff]
    %v432 = vpack.c.bf16 %v426, %v422
    %v433 = vpack.c.bf16 %v427, %v423
    %v434 = vpack.c.bf16 %v428, %v424
    %v435 = vpack.c.bf16 %v429, %v425
    %v436 = vld [vmem:[#allocation9] sm:$0xf]
    %v437 = vld [vmem:[#allocation9 + $0x4] sm:$0xf]
    %v438 = vld [vmem:[#allocation9 + $0x8] sm:$0xf]
    %v439 = vld [vmem:[#allocation9 + $0xc] sm:$0xf]
    %v440 = vld [vmem:[#allocation9 + $0x10] sm:$0xf]
    %v441 = vld [vmem:[#allocation9 + $0x14] sm:$0xf]
    %v442 = vld [vmem:[#allocation9 + $0x18] sm:$0xf]
    %v443 = vld [vmem:[#allocation9 + $0x1c] sm:$0xf]
    %v444 = vld [vmem:[#allocation9 + $0x20] sm:$0xf]
    %v445 = vld [vmem:[#allocation9 + $0x24] sm:$0xf]
    %v446 = vld [vmem:[#allocation9 + $0x28] sm:$0xf]
    %v447 = vld [vmem:[#allocation9 + $0x2c] sm:$0xf]
    %v448 = vld [vmem:[#allocation9 + $0x30] sm:$0xf]
    %v449 = vld [vmem:[#allocation9 + $0x34] sm:$0xf]
    %v450 = vld [vmem:[#allocation9 + $0x38] sm:$0xf]
    %v451 = vld [vmem:[#allocation9 + $0x3c] sm:$0xf]
    %v452 = vld [vmem:[#allocation9 + $0x40] sm:$0xf]
    %v453 = vld [vmem:[#allocation9 + $0x44] sm:$0xf]
    %v454 = vld [vmem:[#allocation9 + $0x48] sm:$0xf]
    %v455 = vld [vmem:[#allocation9 + $0x4c] sm:$0xf]
    %v456 = vld [vmem:[#allocation9 + $0x50] sm:$0xf]
    %v457 = vld [vmem:[#allocation9 + $0x54] sm:$0xf]
    %v458 = vld [vmem:[#allocation9 + $0x58] sm:$0xf]
    %v459 = vld [vmem:[#allocation9 + $0x5c] sm:$0xf]
    %v460 = vld [vmem:[#allocation9 + $0x60] sm:$0xf]
    %v461 = vld [vmem:[#allocation9 + $0x64] sm:$0xf]
    %v462 = vld [vmem:[#allocation9 + $0x68] sm:$0xf]
    %v463 = vld [vmem:[#allocation9 + $0x6c] sm:$0xf]
    %v464 = vld [vmem:[#allocation9 + $0x70] sm:$0xf]
    %v465 = vld [vmem:[#allocation9 + $0x74] sm:$0xf]
    %v466 = vld [vmem:[#allocation9 + $0x78] sm:$0xf]
    %v467 = vld [vmem:[#allocation9 + $0x7c] sm:$0xf]
    %v468 = vld [vmem:[#allocation9 + $0x80] sm:$0xf]
    %v469 = vld [vmem:[#allocation9 + $0x84] sm:$0xf]
    %v470 = vld [vmem:[#allocation9 + $0x88] sm:$0xf]
    %v471 = vld [vmem:[#allocation9 + $0x8c] sm:$0xf]
    %v472 = vld [vmem:[#allocation9 + $0x90] sm:$0xf]
    %v473 = vld [vmem:[#allocation9 + $0x94] sm:$0xf]
    %v474 = vld [vmem:[#allocation9 + $0x98] sm:$0xf]
    %v475 = vld [vmem:[#allocation9 + $0x9c] sm:$0xf]
    %v476 = vld [vmem:[#allocation9 + $0xa0] sm:$0xf]
    %v477 = vld [vmem:[#allocation9 + $0xa4] sm:$0xf]
    %v478 = vld [vmem:[#allocation9 + $0xa8] sm:$0xf]
    %v479 = vld [vmem:[#allocation9 + $0xac] sm:$0xf]
    %v480 = vld [vmem:[#allocation9 + $0xb0] sm:$0xf]
    %v481 = vld [vmem:[#allocation9 + $0xb4] sm:$0xf]
    %v482 = vld [vmem:[#allocation9 + $0xb8] sm:$0xf]
    %v483 = vld [vmem:[#allocation9 + $0xbc] sm:$0xf]
    %v484 = vld [vmem:[#allocation9 + $0xc0] sm:$0xf]
    %v485 = vld [vmem:[#allocation9 + $0xc4] sm:$0xf]
    %v486 = vld [vmem:[#allocation9 + $0xc8] sm:$0xf]
    %v487 = vld [vmem:[#allocation9 + $0xcc] sm:$0xf]
    %v488 = vld [vmem:[#allocation9 + $0xd0] sm:$0xf]
    %v489 = vld [vmem:[#allocation9 + $0xd4] sm:$0xf]
    %v490 = vld [vmem:[#allocation9 + $0xd8] sm:$0xf]
    %v491 = vld [vmem:[#allocation9 + $0xdc] sm:$0xf]
    %v492 = vld [vmem:[#allocation9 + $0xe0] sm:$0xf]
    %v493 = vld [vmem:[#allocation9 + $0xe4] sm:$0xf]
    %v494 = vld [vmem:[#allocation9 + $0xe8] sm:$0xf]
    %v495 = vld [vmem:[#allocation9 + $0xec] sm:$0xf]
    %v496 = vld [vmem:[#allocation9 + $0xf0] sm:$0xf]
    %v497 = vld [vmem:[#allocation9 + $0xf4] sm:$0xf]
    %v498 = vld [vmem:[#allocation9 + $0xf8] sm:$0xf]
    %v499 = vld [vmem:[#allocation9 + $0xfc] sm:$0xf]
    %v564 = vunpack.c.l.b16 %v436
    %v565 = vunpack.c.l.b16 %v437
    %v566 = vunpack.c.l.b16 %v438
    %v567 = vunpack.c.l.b16 %v439
    %v568 = vunpack.c.l.b16 %v440
    %v569 = vunpack.c.l.b16 %v441
    %v570 = vunpack.c.l.b16 %v442
    %v571 = vunpack.c.l.b16 %v443
    %v572 = vunpack.c.l.b16 %v444
    %v573 = vunpack.c.l.b16 %v445
    %v574 = vunpack.c.l.b16 %v446
    %v575 = vunpack.c.l.b16 %v447
    %v576 = vunpack.c.l.b16 %v448
    %v577 = vunpack.c.l.b16 %v449
    %v578 = vunpack.c.l.b16 %v450
    %v579 = vunpack.c.l.b16 %v451
    %v580 = vunpack.c.l.b16 %v452
    %v581 = vunpack.c.l.b16 %v453
    %v582 = vunpack.c.l.b16 %v454
    %v583 = vunpack.c.l.b16 %v455
    %v584 = vunpack.c.l.b16 %v456
    %v585 = vunpack.c.l.b16 %v457
    %v586 = vunpack.c.l.b16 %v458
    %v587 = vunpack.c.l.b16 %v459
    %v588 = vunpack.c.l.b16 %v460
    %v589 = vunpack.c.l.b16 %v461
    %v590 = vunpack.c.l.b16 %v462
    %v591 = vunpack.c.l.b16 %v463
    %v592 = vunpack.c.l.b16 %v464
    %v593 = vunpack.c.l.b16 %v465
    %v594 = vunpack.c.l.b16 %v466
    %v595 = vunpack.c.l.b16 %v467
    %v596 = vunpack.c.l.b16 %v468
    %v597 = vunpack.c.l.b16 %v469
    %v598 = vunpack.c.l.b16 %v470
    %v599 = vunpack.c.l.b16 %v471
    %v600 = vunpack.c.l.b16 %v472
    %v601 = vunpack.c.l.b16 %v473
    %v602 = vunpack.c.l.b16 %v474
    %v603 = vunpack.c.l.b16 %v475
    %v604 = vunpack.c.l.b16 %v476
    %v605 = vunpack.c.l.b16 %v477
    %v606 = vunpack.c.l.b16 %v478
    %v607 = vunpack.c.l.b16 %v479
    %v608 = vunpack.c.l.b16 %v480
    %v609 = vunpack.c.l.b16 %v481
    %v610 = vunpack.c.l.b16 %v482
    %v611 = vunpack.c.l.b16 %v483
    %v612 = vunpack.c.l.b16 %v484
    %v613 = vunpack.c.l.b16 %v485
    %v614 = vunpack.c.l.b16 %v486
    %v615 = vunpack.c.l.b16 %v487
    %v616 = vunpack.c.l.b16 %v488
    %v617 = vunpack.c.l.b16 %v489
    %v618 = vunpack.c.l.b16 %v490
    %v619 = vunpack.c.l.b16 %v491
    %v620 = vunpack.c.l.b16 %v492
    %v621 = vunpack.c.l.b16 %v493
    %v622 = vunpack.c.l.b16 %v494
    %v623 = vunpack.c.l.b16 %v495
    %v624 = vunpack.c.l.b16 %v496
    %v625 = vunpack.c.l.b16 %v497
    %v626 = vunpack.c.l.b16 %v498
    %v627 = vunpack.c.l.b16 %v499
    %v628 = vpack.c.b16 %v565, %v564
    %v629 = vpack.c.b16 %v567, %v566
    %v630 = vpack.c.b16 %v569, %v568
    %v631 = vpack.c.b16 %v571, %v570
    %v632 = vpack.c.b16 %v573, %v572
    %v633 = vpack.c.b16 %v575, %v574
    %v634 = vpack.c.b16 %v577, %v576
    %v635 = vpack.c.b16 %v579, %v578
    %v636 = vpack.c.b16 %v581, %v580
    %v637 = vpack.c.b16 %v583, %v582
    %v638 = vpack.c.b16 %v585, %v584
    %v639 = vpack.c.b16 %v587, %v586
    %v640 = vpack.c.b16 %v589, %v588
    %v641 = vpack.c.b16 %v591, %v590
    %v642 = vpack.c.b16 %v593, %v592
    %v643 = vpack.c.b16 %v595, %v594
    %v644 = vpack.c.b16 %v597, %v596
    %v645 = vpack.c.b16 %v599, %v598
    %v646 = vpack.c.b16 %v601, %v600
    %v647 = vpack.c.b16 %v603, %v602
    %v648 = vpack.c.b16 %v605, %v604
    %v649 = vpack.c.b16 %v607, %v606
    %v650 = vpack.c.b16 %v609, %v608
    %v651 = vpack.c.b16 %v611, %v610
    %v652 = vpack.c.b16 %v613, %v612
    %v653 = vpack.c.b16 %v615, %v614
    %v654 = vpack.c.b16 %v617, %v616
    %v655 = vpack.c.b16 %v619, %v618
    %v656 = vpack.c.b16 %v621, %v620
    %v657 = vpack.c.b16 %v623, %v622
    %v658 = vpack.c.b16 %v625, %v624
    %v659 = vpack.c.b16 %v627, %v626
    %692 = vmatprep.subr.bf16.mxu0 0
    %693 = vmatpush1.bf16.msra.mxu0 %v635
    %694 = vmatprep.subr.bf16.mxu0 0
    %695 = vmatpush1.bf16.msra.mxu0 %v634
    %696 = vmatprep.subr.bf16.mxu0 0
    %697 = vmatpush1.bf16.msra.mxu0 %v633
    %698 = vmatprep.subr.bf16.mxu0 0
    %699 = vmatpush1.bf16.msra.mxu0 %v632
    %700 = vmatprep.subr.bf16.mxu0 0
    %701 = vmatpush1.bf16.msra.mxu0 %v631
    %702 = vmatprep.subr.bf16.mxu0 0
    %703 = vmatpush1.bf16.msra.mxu0 %v630
    %704 = vmatprep.subr.bf16.mxu0 0
    %705 = vmatpush1.bf16.msra.mxu0 %v629
    %706 = vmatprep.subr.bf16.mxu0 0
    %707 = vmatpush1.bf16.msra.mxu0 %v628
    %708 = vmatprep.subr.bf16.mxu0 0
    %709 = vmatpush2.bf16.msra.mxu0 %v643
    %710 = vmatprep.subr.bf16.mxu0 0
    %711 = vmatpush2.bf16.msra.mxu0 %v642
    %712 = vmatprep.subr.bf16.mxu0 0
    %713 = vmatpush2.bf16.msra.mxu0 %v641
    %714 = vmatprep.subr.bf16.mxu0 0
    %715 = vmatpush2.bf16.msra.mxu0 %v640
    %716 = vmatprep.subr.bf16.mxu0 0
    %717 = vmatpush2.bf16.msra.mxu0 %v639
    %718 = vmatprep.subr.bf16.mxu0 0
    %719 = vmatpush2.bf16.msra.mxu0 %v638
    %720 = vmatprep.subr.bf16.mxu0 0
    %721 = vmatpush2.bf16.msra.mxu0 %v637
    %722 = vmatprep.subr.bf16.mxu0 0
    %723 = vmatpush2.bf16.msra.mxu0 %v636
    %724 = vmatprep.mubr.bf16.mxu0 %v433
    %725 = vmatmul.mubr.bf16.gmra.mxu0 %v432
    %v726 = vpop.f32.mrf.mxu0
    %v727 = vadd.f32 0.0, %v726
    %v728 = vpop.f32.mrf.mxu0
    %v729 = vpop.f32.mrf.mxu0
    %v730 = vadd.f32 0.0, %v729
    %v731 = vpop.f32.mrf.mxu0
    %732 = vdwg.mxu0
    %733 = vmatprep.subr.bf16.mxu0 0
    %734 = vmatpush1.bf16.msra.mxu0 %v651
    %735 = vmatprep.subr.bf16.mxu0 0
    %736 = vmatpush1.bf16.msra.mxu0 %v650
    %737 = vmatprep.subr.bf16.mxu0 0
    %738 = vmatpush1.bf16.msra.mxu0 %v649
    %739 = vmatprep.subr.bf16.mxu0 0
    %740 = vmatpush1.bf16.msra.mxu0 %v648
    %741 = vmatprep.subr.bf16.mxu0 0
    %742 = vmatpush1.bf16.msra.mxu0 %v647
    %743 = vmatprep.subr.bf16.mxu0 0
    %744 = vmatpush1.bf16.msra.mxu0 %v646
    %745 = vmatprep.subr.bf16.mxu0 0
    %746 = vmatpush1.bf16.msra.mxu0 %v645
    %747 = vmatprep.subr.bf16.mxu0 0
    %748 = vmatpush1.bf16.msra.mxu0 %v644
    %749 = vmatprep.subr.bf16.mxu0 0
    %750 = vmatpush2.bf16.msra.mxu0 %v659
    %751 = vmatprep.subr.bf16.mxu0 0
    %752 = vmatpush2.bf16.msra.mxu0 %v658
    %753 = vmatprep.subr.bf16.mxu0 0
    %754 = vmatpush2.bf16.msra.mxu0 %v657
    %755 = vmatprep.subr.bf16.mxu0 0
    %756 = vmatpush2.bf16.msra.mxu0 %v656
    %757 = vmatprep.subr.bf16.mxu0 0
    %758 = vmatpush2.bf16.msra.mxu0 %v655
    %759 = vmatprep.subr.bf16.mxu0 0
    %760 = vmatpush2.bf16.msra.mxu0 %v654
    %761 = vmatprep.subr.bf16.mxu0 0
    %762 = vmatpush2.bf16.msra.mxu0 %v653
    %763 = vmatprep.subr.bf16.mxu0 0
    %764 = vmatpush2.bf16.msra.mxu0 %v652
    %765 = vmatprep.mubr.bf16.mxu0 %v435
    %766 = vmatmul.mubr.bf16.gmra.mxu0 %v434
    %v767 = vpop.f32.mrf.mxu0
    %v768 = vadd.f32 %v727, %v767
    %v769 = vpop.f32.mrf.mxu0
    %v770 = vpop.f32.mrf.mxu0
    %v771 = vadd.f32 %v730, %v770
    %v772 = vpop.f32.mrf.mxu0
    %773 = vdwg.mxu0
    %v774 = vadd.f32 %v430, %v768
    %v775 = vadd.f32 %v431, %v771
    %776 = vst [vmem:[#allocation2] sm:$0xff] %v774
    %777 = vst [vmem:[#allocation2 + $0x8] sm:$0xff] %v775
    // Predicated region
    $region50: #{tpu_custom_call.1} parent=1 // pred_check
      %p778 = pneg %p81
    $region51: #{tpu_custom_call.1} parent=1 // pred_check_branch
      %780 = sbr.rel (%p778) target = $region53
    $region52: #{tpu_custom_call.1} parent=1 // pred_region
      %v781 = vld [vmem:[#allocation2] sm:$0xff]
      %v782 = vld [vmem:[#allocation2 + $0x8] sm:$0xff]
      %v783 = vld [vmem:[%s4] sm:$0x1]
      %v785 = vlaneseq
      %v786 = vshrl.u32 %v785, 7
      %v787 = vsub.s32 0, %v786
      %v788 = vrot.slane %v783, %v787
      %v790 = vadd.f32 %v781, %v788
      %v791 = vadd.f32 %v782, %v788
      %v792 = vld [vmem:[#allocation3] sm:$0xff]
      %v793 = vld [vmem:[#allocation3 + $0x8] sm:$0xff]
      %v794 = vadd.f32 %v790, %v792
      %v795 = vadd.f32 %v791, %v793
      %796 = vadd.xlane.f32.xlu0 %v794
      %v797 = vpop.xlane.xlu0 %796
      %798 = vadd.xlane.f32.xlu0 %v795
      %v799 = vpop.xlane.xlu0 %798
      %v800 = vrcp.pop 128.0
      %v801 = vmul.f32 %v797, %v800
      %v802 = vmul.f32 %v799, %v800
      %v803 = vsub.f32 %v794, %v801
      %v804 = vsub.f32 %v795, %v802
      %v805 = vmul.f32 %v803, %v803
      %v806 = vmul.f32 %v804, %v804
      %807 = vadd.xlane.f32.xlu0 %v805
      %v808 = vpop.xlane.xlu0 %807
      %809 = vadd.xlane.f32.xlu0 %v806
      %v810 = vpop.xlane.xlu0 %809
      %v811 = vmul.f32 %v808, %v800
      %v812 = vmul.f32 %v810, %v800
      %v813 = vadd.f32 %v811, 1e-05
      %v814 = vadd.f32 %v812, 1e-05
      %v815 = vrsqrt.pop %v813
      %v816 = vrsqrt.pop %v814
      %v817 = vmul.f32 %v803, %v815
      %v818 = vmul.f32 %v804, %v816
      %v819 = vld [vmem:[%s5] sm:$0x1]
      %v821 = vlaneseq
      %v822 = vshrl.u32 %v821, 7
      %v823 = vsub.s32 0, %v822
      %v824 = vrot.slane %v819, %v823
      %v826 = vmul.f32 %v817, %v824
      %v827 = vmul.f32 %v818, %v824
      %v828 = vld [vmem:[%s6] sm:$0x1]
      %v830 = vlaneseq
      %v831 = vshrl.u32 %v830, 7
      %v832 = vsub.s32 0, %v831
      %v833 = vrot.slane %v828, %v832
      %v835 = vadd.f32 %v826, %v833
      %v836 = vadd.f32 %v827, %v833
      %837 = vst [vmem:[#allocation11] sm:$0xff] %v835
      %838 = vst [vmem:[#allocation11 + $0x8] sm:$0xff] %v836
    $region53: #{tpu_custom_call.1} parent=1 // pred_fallthru
      _
    // Predicated region
    $region54: #{tpu_custom_call.1} parent=1 // pred_check
      _
    $region55: #{tpu_custom_call.1} parent=1 // pred_check_branch
      %840 = sbr.rel (0) target = $region57
    $region56: #{tpu_custom_call.1} parent=1 // pred_region
      %s842 = ssub.s32 256, 256
      %843 = vsyncadd [#allocation5], %s842
      %s844 = sshll.u32 [#allocation11], 4
      %s845 = int_to_ptr.vmem [resolvable:$true] %s844
      %850 = dma.vmem_to_hbm [thread:$0]  %s845, 256, %s7, [#allocation5], 128, 128, 8
    $region57: #{tpu_custom_call.1} parent=1 // pred_fallthru
      _
    // Predicated region
    $region58: #{tpu_custom_call.1} parent=1 // pred_check
      _
    $region59: #{tpu_custom_call.1} parent=1 // pred_check_branch
      %852 = sbr.rel (0) target = $region61
    $region60: #{tpu_custom_call.1} parent=1 // pred_region
      %853 = dma.done [#allocation5], 256
    $region61: #{tpu_custom_call.1} parent=1 // pred_fallthru
      _
    %854 = vsyncpa [#allocation4], 1
    %855 = vsyncpa [#allocation7], 1
    %856 = vsyncpa [#allocation10], 1
    %857 = vsyncpa [#allocation5], 1

// kernel: tpu_custom_call.1
$region0: #{tpu_custom_call.1}
  #allocation0 [shape = 'u32[]', space=smem, size = 0x4, offset = 0x4, fixed_abs, tag = 'smem constant byte address 0x4 - core index']
  #allocation1 [shape = 'u32[144,128]{1,0:T(1,128)}', space=vmem, size = 0x12000, scoped, tag = 'internal scratch']
  #allocation2 [shape = 'f32[16,128]{1,0:T(8,128)}', space=vmem, size = 0x2000, scoped, tag = 'scratch operand']
  %s0 = inlined_call_operand.hbm [shape: f32[16,128], index: 0, kind: input, shape index: {}]
  %s1 = inlined_call_operand.hbm [shape: bf16[128,512], index: 1, kind: input, shape index: {}]
  %s2 = inlined_call_operand.hbm [shape: f32[1,512], index: 2, kind: input, shape index: {}]
  %s3 = inlined_call_operand.hbm [shape: bf16[512,128], index: 3, kind: input, shape index: {}]
  %s4 = inlined_call_operand.vmem [shape: f32[1,128], index: 4, kind: input, shape index: {}]
  %s5 = inlined_call_operand.vmem [shape: f32[1,128], index: 5, kind: input, shape index: {}]
  %s6 = inlined_call_operand.vmem [shape: f32[1,128], index: 6, kind: input, shape index: {}]
  %s7 = inlined_call_operand.hbm [shape: f32[16,128], index: 7, kind: output, shape index: {}]
  %s8 = sld [smem:[#allocation0]]
  $region62: #{tpu_custom_call.1} parent=0
    _
  %s10 = ssub.s32 1, %s8
  %s11 = scalar_select 0, %s10, %s8
  $region1: #{tpu_custom_call.1} parent=0
    #allocation3 [shape = 'u8[8192]{0}', space=vmem, size = 0x2000, scoped, tag = 'input window, operand 0, single buffered']
    #allocation4 [shape = 's32[1]{0}', space=sflag, size = 0x4, scoped, tag = 'scoped memory for tpu_custom_call.1']
    #allocation5 [shape = 's32[1]{0}', space=sflag, size = 0x4, scoped, tag = 'scoped memory for tpu_custom_call.1']
    #allocation6 [shape = 'u8[131072]{0}', space=vmem, size = 0x20000, scoped, tag = 'input window, operand 1, single buffered']
    #allocation7 [shape = 's32[1]{0}', space=sflag, size = 0x4, scoped, tag = 'scoped memory for tpu_custom_call.1']
    #allocation8 [shape = 'u8[2048]{0}', space=vmem, size = 0x800, scoped, tag = 'input window, operand 2, single buffered']
    #allocation9 [shape = 'u8[131072]{0}', space=vmem, size = 0x20000, scoped, tag = 'input window, operand 3, single buffered']
    #allocation10 [shape = 's32[1]{0}', space=sflag, size = 0x4, scoped, tag = 'scoped memory for tpu_custom_call.1']
    #allocation11 [shape = 'u8[8192]{0}', space=vmem, size = 0x2000, scoped, tag = 'output window, operand 0, single buffered']
    %12 = vsyncpa [#allocation4], 0
    %13 = vsyncpa [#allocation7], 0
    %14 = vsyncpa [#allocation10], 0
    %15 = vsyncpa [#allocation5], 0
    // Predicated region
    $region2: #{tpu_custom_call.1} parent=1 // pred_check
      _
    $region3: #{tpu_custom_call.1} parent=1 // pred_check_branch
      %17 = sbr.rel (0) target = $region5
    $region4: #{tpu_custom_call.1} parent=1 // pred_region
      %s19 = ssub.s32 256, 256
      %20 = vsyncadd [#allocation4], %s19
      %s21 = sshll.u32 [#allocation3], 4
      %s22 = int_to_ptr.vmem [resolvable:$true] %s21
      %27 = dma.hbm_to_vmem [thread:$0]  %s0, 256, %s22, [#allocation4], 128, 128, 8
    $region5: #{tpu_custom_call.1} parent=1 // pred_fallthru
      _
    // Predicated region
    $region6: #{tpu_custom_call.1} parent=1 // pred_check
      _
    $region7: #{tpu_custom_call.1} parent=1 // pred_check_branch
      %29 = sbr.rel (0) target = $region9
    $region8: #{tpu_custom_call.1} parent=1 // pred_region
      %s31 = ssub.s32 4096, 4096
      %32 = vsyncadd [#allocation7], %s31
      %s33 = sshll.u32 [#allocation6], 4
      %s34 = int_to_ptr.vmem [resolvable:$true] %s33
      %39 = dma.hbm_to_vmem [thread:$0]  %s1, 4096, %s34, [#allocation7], 256, 256, 16
    $region9: #{tpu_custom_call.1} parent=1 // pred_fallthru
      _
    // Predicated region
    $region10: #{tpu_custom_call.1} parent=1 // pred_check
      _
    $region11: #{tpu_custom_call.1} parent=1 // pred_check_branch
      %41 = sbr.rel (0) target = $region13
    $region12: #{tpu_custom_call.1} parent=1 // pred_region
      %s43 = ssub.s32 64, 64
      %44 = vsyncadd [#allocation7], %s43
      %s46 = sshll.u32 [#allocation8], 4
      %s47 = int_to_ptr.vmem [resolvable:$true] %s46
      %49 = dma.hbm_to_vmem [thread:$0]  %s2, 64, %s47, [#allocation7]
    $region13: #{tpu_custom_call.1} parent=1 // pred_fallthru
      _
    // Predicated region
    $region14: #{tpu_custom_call.1} parent=1 // pred_check
      _
    $region15: #{tpu_custom_call.1} parent=1 // pred_check_branch
      %51 = sbr.rel (0) target = $region17
    $region16: #{tpu_custom_call.1} parent=1 // pred_region
      %s53 = ssub.s32 4096, 4096
      %54 = vsyncadd [#allocation10], %s53
      %s55 = sshll.u32 [#allocation9], 4
      %s56 = int_to_ptr.vmem [resolvable:$true] %s55
      %61 = dma.hbm_to_vmem [thread:$0]  %s3, 4096, %s56, [#allocation10], 64, 64, 4
    $region17: #{tpu_custom_call.1} parent=1 // pred_fallthru
      _
    // Predicated region
    $region18: #{tpu_custom_call.1} parent=1 // pred_check
      _
    $region19: #{tpu_custom_call.1} parent=1 // pred_check_branch
      %63 = sbr.rel (0) target = $region21
    $region20: #{tpu_custom_call.1} parent=1 // pred_region
      _
    $region21: #{tpu_custom_call.1} parent=1 // pred_fallthru
      _
    // Predicated region
    $region22: #{tpu_custom_call.1} parent=1 // pred_check
      _
    $region23: #{tpu_custom_call.1} parent=1 // pred_check_branch
      %65 = sbr.rel (0) target = $region25
    $region24: #{tpu_custom_call.1} parent=1 // pred_region
      _
    $region25: #{tpu_custom_call.1} parent=1 // pred_fallthru
      _
    // Predicated region
    $region26: #{tpu_custom_call.1} parent=1 // pred_check
      _
    $region27: #{tpu_custom_call.1} parent=1 // pred_check_branch
      %67 = sbr.rel (0) target = $region29
    $region28: #{tpu_custom_call.1} parent=1 // pred_region
      _
    $region29: #{tpu_custom_call.1} parent=1 // pred_fallthru
      _
    // Predicated region
    $region30: #{tpu_custom_call.1} parent=1 // pred_check
      _
    $region31: #{tpu_custom_call.1} parent=1 // pred_check_branch
      %69 = sbr.rel (0) target = $region33
    $region32: #{tpu_custom_call.1} parent=1 // pred_region
      %70 = dma.done [#allocation4], 256
    $region33: #{tpu_custom_call.1} parent=1 // pred_fallthru
      _
    // Predicated region
    $region34: #{tpu_custom_call.1} parent=1 // pred_check
      _
    $region35: #{tpu_custom_call.1} parent=1 // pred_check_branch
      %72 = sbr.rel (0) target = $region37
    $region36: #{tpu_custom_call.1} parent=1 // pred_region
      %73 = dma.done [#allocation7], 4096
    $region37: #{tpu_custom_call.1} parent=1 // pred_fallthru
      _
    // Predicated region
    $region38: #{tpu_custom_call.1} parent=1 // pred_check
      _
    $region39: #{tpu_custom_call.1} parent=1 // pred_check_branch
      %75 = sbr.rel (0) target = $region41
    $region40: #{tpu_custom_call.1} parent=1 // pred_region
      %76 = dma.done [#allocation7], 64
    $region41: #{tpu_custom_call.1} parent=1 // pred_fallthru
      _
    // Predicated region
    $region42: #{tpu_custom_call.1} parent=1 // pred_check
      _
    $region43: #{tpu_custom_call.1} parent=1 // pred_check_branch
      %78 = sbr.rel (0) target = $region45
    $region44: #{tpu_custom_call.1} parent=1 // pred_region
      %79 = dma.done [#allocation10], 4096
    $region45: #{tpu_custom_call.1} parent=1 // pred_fallthru
      _
    %p81 = scmp.eq.s32.totalorder 0, 0
    // Predicated region
    $region46: #{tpu_custom_call.1} parent=1 // pred_check
      %p82 = pneg %p81
    $region47: #{tpu_custom_call.1} parent=1 // pred_check_branch
      %84 = sbr.rel (%p82) target = $region49
    $region48: #{tpu_custom_call.1} parent=1 // pred_region
      %85 = vst [vmem:[#allocation2] sm:$0xff] 0.0
      %86 = vst [vmem:[#allocation2 + $0x8] sm:$0xff] 0.0
    $region49: #{tpu_custom_call.1} parent=1 // pred_fallthru
      _
    %v87 = vld [vmem:[#allocation3] sm:$0xff]
    %v88 = vld [vmem:[#allocation3 + $0x8] sm:$0xff]
    %v89 = vpack.c.bf16 %v88, %v87
    %v90 = vld [vmem:[#allocation6] sm:$0xff]
    %v91 = vld [vmem:[#allocation6 + $0x8] sm:$0xff]
    %v92 = vld [vmem:[#allocation6 + $0x10] sm:$0xff]
    %v93 = vld [vmem:[#allocation6 + $0x18] sm:$0xff]
    %v94 = vld [vmem:[#allocation6 + $0x20] sm:$0xff]
    %v95 = vld [vmem:[#allocation6 + $0x28] sm:$0xff]
    %v96 = vld [vmem:[#allocation6 + $0x30] sm:$0xff]
    %v97 = vld [vmem:[#allocation6 + $0x38] sm:$0xff]
    %v98 = vld [vmem:[#allocation6 + $0x40] sm:$0xff]
    %v99 = vld [vmem:[#allocation6 + $0x48] sm:$0xff]
    %v100 = vld [vmem:[#allocation6 + $0x50] sm:$0xff]
    %v101 = vld [vmem:[#allocation6 + $0x58] sm:$0xff]
    %v102 = vld [vmem:[#allocation6 + $0x60] sm:$0xff]
    %v103 = vld [vmem:[#allocation6 + $0x68] sm:$0xff]
    %v104 = vld [vmem:[#allocation6 + $0x70] sm:$0xff]
    %v105 = vld [vmem:[#allocation6 + $0x78] sm:$0xff]
    %v106 = vld [vmem:[#allocation6 + $0x80] sm:$0xff]
    %v107 = vld [vmem:[#allocation6 + $0x88] sm:$0xff]
    %v108 = vld [vmem:[#allocation6 + $0x90] sm:$0xff]
    %v109 = vld [vmem:[#allocation6 + $0x98] sm:$0xff]
    %v110 = vld [vmem:[#allocation6 + $0xa0] sm:$0xff]
    %v111 = vld [vmem:[#allocation6 + $0xa8] sm:$0xff]
    %v112 = vld [vmem:[#allocation6 + $0xb0] sm:$0xff]
    %v113 = vld [vmem:[#allocation6 + $0xb8] sm:$0xff]
    %v114 = vld [vmem:[#allocation6 + $0xc0] sm:$0xff]
    %v115 = vld [vmem:[#allocation6 + $0xc8] sm:$0xff]
    %v116 = vld [vmem:[#allocation6 + $0xd0] sm:$0xff]
    %v117 = vld [vmem:[#allocation6 + $0xd8] sm:$0xff]
    %v118 = vld [vmem:[#allocation6 + $0xe0] sm:$0xff]
    %v119 = vld [vmem:[#allocation6 + $0xe8] sm:$0xff]
    %v120 = vld [vmem:[#allocation6 + $0xf0] sm:$0xff]
    %v121 = vld [vmem:[#allocation6 + $0xf8] sm:$0xff]
    %v122 = vld [vmem:[#allocation8] sm:$0xf]
    %v124 = vlaneseq
    %v125 = vshrl.u32 %v124, 7
    %v126 = vsub.s32 0, %v125
    %v127 = vrot.slane %v122, %v126
    %v128 = vlaneseq
    %v129 = vshrl.u32 %v128, 7
    %v130 = vsub.s32 1, %v129
    %v131 = vrot.slane %v122, %v130
    %v132 = vlaneseq
    %v133 = vshrl.u32 %v132, 7
    %v134 = vsub.s32 2, %v133
    %v135 = vrot.slane %v122, %v134
    %v136 = vlaneseq
    %v137 = vshrl.u32 %v136, 7
    %v138 = vsub.s32 3, %v137
    %v139 = vrot.slane %v122, %v138
    %v176 = vunpack.c.l.b16 %v90
    %v177 = vunpack.c.h.b16 %v90
    %v178 = vunpack.c.l.b16 %v91
    %v179 = vunpack.c.h.b16 %v91
    %v180 = vunpack.c.l.b16 %v92
    %v181 = vunpack.c.h.b16 %v92
    %v182 = vunpack.c.l.b16 %v93
    %v183 = vunpack.c.h.b16 %v93
    %v184 = vunpack.c.l.b16 %v94
    %v185 = vunpack.c.h.b16 %v94
    %v186 = vunpack.c.l.b16 %v95
    %v187 = vunpack.c.h.b16 %v95
    %v188 = vunpack.c.l.b16 %v96
    %v189 = vunpack.c.h.b16 %v96
    %v190 = vunpack.c.l.b16 %v97
    %v191 = vunpack.c.h.b16 %v97
    %v192 = vunpack.c.l.b16 %v98
    %v193 = vunpack.c.h.b16 %v98
    %v194 = vunpack.c.l.b16 %v99
    %v195 = vunpack.c.h.b16 %v99
    %v196 = vunpack.c.l.b16 %v100
    %v197 = vunpack.c.h.b16 %v100
    %v198 = vunpack.c.l.b16 %v101
    %v199 = vunpack.c.h.b16 %v101
    %v200 = vunpack.c.l.b16 %v102
    %v201 = vunpack.c.h.b16 %v102
    %v202 = vunpack.c.l.b16 %v103
    %v203 = vunpack.c.h.b16 %v103
    %v204 = vunpack.c.l.b16 %v104
    %v205 = vunpack.c.h.b16 %v104
    %v206 = vunpack.c.l.b16 %v105
    %v207 = vunpack.c.h.b16 %v105
    %v208 = vunpack.c.l.b16 %v106
    %v209 = vunpack.c.h.b16 %v106
    %v210 = vunpack.c.l.b16 %v107
    %v211 = vunpack.c.h.b16 %v107
    %v212 = vunpack.c.l.b16 %v108
    %v213 = vunpack.c.h.b16 %v108
    %v214 = vunpack.c.l.b16 %v109
    %v215 = vunpack.c.h.b16 %v109
    %v216 = vunpack.c.l.b16 %v110
    %v217 = vunpack.c.h.b16 %v110
    %v218 = vunpack.c.l.b16 %v111
    %v219 = vunpack.c.h.b16 %v111
    %v220 = vunpack.c.l.b16 %v112
    %v221 = vunpack.c.h.b16 %v112
    %v222 = vunpack.c.l.b16 %v113
    %v223 = vunpack.c.h.b16 %v113
    %v224 = vunpack.c.l.b16 %v114
    %v225 = vunpack.c.h.b16 %v114
    %v226 = vunpack.c.l.b16 %v115
    %v227 = vunpack.c.h.b16 %v115
    %v228 = vunpack.c.l.b16 %v116
    %v229 = vunpack.c.h.b16 %v116
    %v230 = vunpack.c.l.b16 %v117
    %v231 = vunpack.c.h.b16 %v117
    %v232 = vunpack.c.l.b16 %v118
    %v233 = vunpack.c.h.b16 %v118
    %v234 = vunpack.c.l.b16 %v119
    %v235 = vunpack.c.h.b16 %v119
    %v236 = vunpack.c.l.b16 %v120
    %v237 = vunpack.c.h.b16 %v120
    %v238 = vunpack.c.l.b16 %v121
    %v239 = vunpack.c.h.b16 %v121
    %v240 = vpack.c.b16 %v180, %v176
    %v241 = vpack.c.b16 %v181, %v177
    %v242 = vpack.c.b16 %v182, %v178
    %v243 = vpack.c.b16 %v183, %v179
    %v244 = vpack.c.b16 %v188, %v184
    %v245 = vpack.c.b16 %v189, %v185
    %v246 = vpack.c.b16 %v190, %v186
    %v247 = vpack.c.b16 %v191, %v187
    %v248 = vpack.c.b16 %v196, %v192
    %v249 = vpack.c.b16 %v197, %v193
    %v250 = vpack.c.b16 %v198, %v194
    %v251 = vpack.c.b16 %v199, %v195
    %v252 = vpack.c.b16 %v204, %v200
    %v253 = vpack.c.b16 %v205, %v201
    %v254 = vpack.c.b16 %v206, %v202
    %v255 = vpack.c.b16 %v207, %v203
    %v256 = vpack.c.b16 %v212, %v208
    %v257 = vpack.c.b16 %v213, %v209
    %v258 = vpack.c.b16 %v214, %v210
    %v259 = vpack.c.b16 %v215, %v211
    %v260 = vpack.c.b16 %v220, %v216
    %v261 = vpack.c.b16 %v221, %v217
    %v262 = vpack.c.b16 %v222, %v218
    %v263 = vpack.c.b16 %v223, %v219
    %v264 = vpack.c.b16 %v228, %v224
    %v265 = vpack.c.b16 %v229, %v225
    %v266 = vpack.c.b16 %v230, %v226
    %v267 = vpack.c.b16 %v231, %v227
    %v268 = vpack.c.b16 %v236, %v232
    %v269 = vpack.c.b16 %v237, %v233
    %v270 = vpack.c.b16 %v238, %v234
    %v271 = vpack.c.b16 %v239, %v235
    %304 = vmatprep.subr.bf16.mxu0 %v269
    %305 = vmatpush1.bf16.msra.mxu0 %v268
    %306 = vmatprep.subr.bf16.mxu0 %v265
    %307 = vmatpush1.bf16.msra.mxu0 %v264
    %308 = vmatprep.subr.bf16.mxu0 %v261
    %309 = vmatpush1.bf16.msra.mxu0 %v260
    %310 = vmatprep.subr.bf16.mxu0 %v257
    %311 = vmatpush1.bf16.msra.mxu0 %v256
    %312 = vmatprep.subr.bf16.mxu0 %v253
    %313 = vmatpush1.bf16.msra.mxu0 %v252
    %314 = vmatprep.subr.bf16.mxu0 %v249
    %315 = vmatpush1.bf16.msra.mxu0 %v248
    %316 = vmatprep.subr.bf16.mxu0 %v245
    %317 = vmatpush1.bf16.msra.mxu0 %v244
    %318 = vmatprep.subr.bf16.mxu0 %v241
    %319 = vmatpush1.bf16.msra.mxu0 %v240
    %320 = vmatprep.subr.bf16.mxu0 0
    %321 = vmatpush2.bf16.msra.mxu0 0
    %322 = vmatprep.subr.bf16.mxu0 0
    %323 = vmatpush2.bf16.msra.mxu0 0
    %324 = vmatprep.subr.bf16.mxu0 0
    %325 = vmatpush2.bf16.msra.mxu0 0
    %326 = vmatprep.subr.bf16.mxu0 0
    %327 = vmatpush2.bf16.msra.mxu0 0
    %328 = vmatprep.subr.bf16.mxu0 0
    %329 = vmatpush2.bf16.msra.mxu0 0
    %330 = vmatprep.subr.bf16.mxu0 0
    %331 = vmatpush2.bf16.msra.mxu0 0
    %332 = vmatprep.subr.bf16.mxu0 0
    %333 = vmatpush2.bf16.msra.mxu0 0
    %334 = vmatprep.subr.bf16.mxu0 0
    %335 = vmatpush2.bf16.msra.mxu0 0
    %336 = vmatprep.mubr.bf16.mxu0 0
    %337 = vmatmul.mubr.bf16.gmra.mxu0 %v89
    %v338 = vpop.f32.mrf.mxu0
    %v339 = vadd.f32 %v127, %v338
    %v340 = vpop.f32.mrf.mxu0
    %v341 = vadd.f32 %v131, %v340
    %v342 = vpop.f32.mrf.mxu0
    %v343 = vadd.f32 %v127, %v342
    %v344 = vpop.f32.mrf.mxu0
    %v345 = vadd.f32 %v131, %v344
    %346 = vdwg.mxu0
    %347 = vmatprep.subr.bf16.mxu0 %v271
    %348 = vmatpush1.bf16.msra.mxu0 %v270
    %349 = vmatprep.subr.bf16.mxu0 %v267
    %350 = vmatpush1.bf16.msra.mxu0 %v266
    %351 = vmatprep.subr.bf16.mxu0 %v263
    %352 = vmatpush1.bf16.msra.mxu0 %v262
    %353 = vmatprep.subr.bf16.mxu0 %v259
    %354 = vmatpush1.bf16.msra.mxu0 %v258
    %355 = vmatprep.subr.bf16.mxu0 %v255
    %356 = vmatpush1.bf16.msra.mxu0 %v254
    %357 = vmatprep.subr.bf16.mxu0 %v251
    %358 = vmatpush1.bf16.msra.mxu0 %v250
    %359 = vmatprep.subr.bf16.mxu0 %v247
    %360 = vmatpush1.bf16.msra.mxu0 %v246
    %361 = vmatprep.subr.bf16.mxu0 %v243
    %362 = vmatpush1.bf16.msra.mxu0 %v242
    %363 = vmatprep.subr.bf16.mxu0 0
    %364 = vmatpush2.bf16.msra.mxu0 0
    %365 = vmatprep.subr.bf16.mxu0 0
    %366 = vmatpush2.bf16.msra.mxu0 0
    %367 = vmatprep.subr.bf16.mxu0 0
    %368 = vmatpush2.bf16.msra.mxu0 0
    %369 = vmatprep.subr.bf16.mxu0 0
    %370 = vmatpush2.bf16.msra.mxu0 0
    %371 = vmatprep.subr.bf16.mxu0 0
    %372 = vmatpush2.bf16.msra.mxu0 0
    %373 = vmatprep.subr.bf16.mxu0 0
    %374 = vmatpush2.bf16.msra.mxu0 0
    %375 = vmatprep.subr.bf16.mxu0 0
    %376 = vmatpush2.bf16.msra.mxu0 0
    %377 = vmatprep.subr.bf16.mxu0 0
    %378 = vmatpush2.bf16.msra.mxu0 0
    %379 = vmatprep.mubr.bf16.mxu0 0
    %380 = vmatmul.mubr.bf16.gmra.mxu0 %v89
    %v381 = vpop.f32.mrf.mxu0
    %v382 = vadd.f32 %v135, %v381
    %v383 = vpop.f32.mrf.mxu0
    %v384 = vadd.f32 %v139, %v383
    %v385 = vpop.f32.mrf.mxu0
    %v386 = vadd.f32 %v135, %v385
    %v387 = vpop.f32.mrf.mxu0
    %v388 = vadd.f32 %v139, %v387
    %389 = vdwg.mxu0
    %v390 = vmul.f32 %v339, 0.5
    %v391 = vmul.f32 %v341, 0.5
    %v392 = vmul.f32 %v382, 0.5
    %v393 = vmul.f32 %v384, 0.5
    %v394 = vmul.f32 %v343, 0.5
    %v395 = vmul.f32 %v345, 0.5
    %v396 = vmul.f32 %v386, 0.5
    %v397 = vmul.f32 %v388, 0.5
    %v398 = vmul.f32 %v339, 0.70710677
    %v399 = vmul.f32 %v341, 0.70710677
    %v400 = vmul.f32 %v382, 0.70710677
    %v401 = vmul.f32 %v384, 0.70710677
    %v402 = vmul.f32 %v343, 0.70710677
    %v403 = vmul.f32 %v345, 0.70710677
    %v404 = vmul.f32 %v386, 0.70710677
    %v405 = vmul.f32 %v388, 0.70710677
    %v406 = verf.f32.pop %v398
    %v407 = verf.f32.pop %v399
    %v408 = verf.f32.pop %v400
    %v409 = verf.f32.pop %v401
    %v410 = verf.f32.pop %v402
    %v411 = verf.f32.pop %v403
    %v412 = verf.f32.pop %v404
    %v413 = verf.f32.pop %v405
    %v414 = vadd.f32 %v406, 1.0
    %v415 = vadd.f32 %v407, 1.0
    %v416 = vadd.f32 %v408, 1.0
    %v417 = vadd.f32 %v409, 1.0
    %v418 = vadd.f32 %v410, 1.0
    %v419 = vadd.f32 %v411, 1.0
    %v420 = vadd.f32 %v412, 1.0
    %v421 = vadd.f32 %v413, 1.0
    %v422 = vmul.f32 %v390, %v414
    %v423 = vmul.f32 %v391, %v415
    %v424 = vmul.f32 %v392, %v416
    %v425 = vmul.f32 %v393, %v417
    %v426 = vmul.f32 %v394, %v418
    %v427 = vmul.f32 %v395, %v419
    %v428 = vmul.f32 %v396, %v420
    %v429 = vmul.f32 %v397, %v421
    %v430 = vld [vmem:[#allocation2] sm:$0xff]
    %v431 = vld [vmem:[#allocation2 + $0x8] sm:$0xff]
    %v432 = vpack.c.bf16 %v426, %v422
    %v433 = vpack.c.bf16 %v427, %v423
    %v434 = vpack.c.bf16 %v428, %v424
    %v435 = vpack.c.bf16 %v429, %v425
    %v436 = vld [vmem:[#allocation9] sm:$0xf]
    %v437 = vld [vmem:[#allocation9 + $0x4] sm:$0xf]
    %v438 = vld [vmem:[#allocation9 + $0x8] sm:$0xf]
    %v439 = vld [vmem:[#allocation9 + $0xc] sm:$0xf]
    %v440 = vld [vmem:[#allocation9 + $0x10] sm:$0xf]
    %v441 = vld [vmem:[#allocation9 + $0x14] sm:$0xf]
    %v442 = vld [vmem:[#allocation9 + $0x18] sm:$0xf]
    %v443 = vld [vmem:[#allocation9 + $0x1c] sm:$0xf]
    %v444 = vld [vmem:[#allocation9 + $0x20] sm:$0xf]
    %v445 = vld [vmem:[#allocation9 + $0x24] sm:$0xf]
    %v446 = vld [vmem:[#allocation9 + $0x28] sm:$0xf]
    %v447 = vld [vmem:[#allocation9 + $0x2c] sm:$0xf]
    %v448 = vld [vmem:[#allocation9 + $0x30] sm:$0xf]
    %v449 = vld [vmem:[#allocation9 + $0x34] sm:$0xf]
    %v450 = vld [vmem:[#allocation9 + $0x38] sm:$0xf]
    %v451 = vld [vmem:[#allocation9 + $0x3c] sm:$0xf]
    %v452 = vld [vmem:[#allocation9 + $0x40] sm:$0xf]
    %v453 = vld [vmem:[#allocation9 + $0x44] sm:$0xf]
    %v454 = vld [vmem:[#allocation9 + $0x48] sm:$0xf]
    %v455 = vld [vmem:[#allocation9 + $0x4c] sm:$0xf]
    %v456 = vld [vmem:[#allocation9 + $0x50] sm:$0xf]
    %v457 = vld [vmem:[#allocation9 + $0x54] sm:$0xf]
    %v458 = vld [vmem:[#allocation9 + $0x58] sm:$0xf]
    %v459 = vld [vmem:[#allocation9 + $0x5c] sm:$0xf]
    %v460 = vld [vmem:[#allocation9 + $0x60] sm:$0xf]
    %v461 = vld [vmem:[#allocation9 + $0x64] sm:$0xf]
    %v462 = vld [vmem:[#allocation9 + $0x68] sm:$0xf]
    %v463 = vld [vmem:[#allocation9 + $0x6c] sm:$0xf]
    %v464 = vld [vmem:[#allocation9 + $0x70] sm:$0xf]
    %v465 = vld [vmem:[#allocation9 + $0x74] sm:$0xf]
    %v466 = vld [vmem:[#allocation9 + $0x78] sm:$0xf]
    %v467 = vld [vmem:[#allocation9 + $0x7c] sm:$0xf]
    %v468 = vld [vmem:[#allocation9 + $0x80] sm:$0xf]
    %v469 = vld [vmem:[#allocation9 + $0x84] sm:$0xf]
    %v470 = vld [vmem:[#allocation9 + $0x88] sm:$0xf]
    %v471 = vld [vmem:[#allocation9 + $0x8c] sm:$0xf]
    %v472 = vld [vmem:[#allocation9 + $0x90] sm:$0xf]
    %v473 = vld [vmem:[#allocation9 + $0x94] sm:$0xf]
    %v474 = vld [vmem:[#allocation9 + $0x98] sm:$0xf]
    %v475 = vld [vmem:[#allocation9 + $0x9c] sm:$0xf]
    %v476 = vld [vmem:[#allocation9 + $0xa0] sm:$0xf]
    %v477 = vld [vmem:[#allocation9 + $0xa4] sm:$0xf]
    %v478 = vld [vmem:[#allocation9 + $0xa8] sm:$0xf]
    %v479 = vld [vmem:[#allocation9 + $0xac] sm:$0xf]
    %v480 = vld [vmem:[#allocation9 + $0xb0] sm:$0xf]
    %v481 = vld [vmem:[#allocation9 + $0xb4] sm:$0xf]
    %v482 = vld [vmem:[#allocation9 + $0xb8] sm:$0xf]
    %v483 = vld [vmem:[#allocation9 + $0xbc] sm:$0xf]
    %v484 = vld [vmem:[#allocation9 + $0xc0] sm:$0xf]
    %v485 = vld [vmem:[#allocation9 + $0xc4] sm:$0xf]
    %v486 = vld [vmem:[#allocation9 + $0xc8] sm:$0xf]
    %v487 = vld [vmem:[#allocation9 + $0xcc] sm:$0xf]
    %v488 = vld [vmem:[#allocation9 + $0xd0] sm:$0xf]
    %v489 = vld [vmem:[#allocation9 + $0xd4] sm:$0xf]
    %v490 = vld [vmem:[#allocation9 + $0xd8] sm:$0xf]
    %v491 = vld [vmem:[#allocation9 + $0xdc] sm:$0xf]
    %v492 = vld [vmem:[#allocation9 + $0xe0] sm:$0xf]
    %v493 = vld [vmem:[#allocation9 + $0xe4] sm:$0xf]
    %v494 = vld [vmem:[#allocation9 + $0xe8] sm:$0xf]
    %v495 = vld [vmem:[#allocation9 + $0xec] sm:$0xf]
    %v496 = vld [vmem:[#allocation9 + $0xf0] sm:$0xf]
    %v497 = vld [vmem:[#allocation9 + $0xf4] sm:$0xf]
    %v498 = vld [vmem:[#allocation9 + $0xf8] sm:$0xf]
    %v499 = vld [vmem:[#allocation9 + $0xfc] sm:$0xf]
    %v564 = vunpack.c.l.b16 %v436
    %v565 = vunpack.c.l.b16 %v437
    %v566 = vunpack.c.l.b16 %v438
    %v567 = vunpack.c.l.b16 %v439
    %v568 = vunpack.c.l.b16 %v440
    %v569 = vunpack.c.l.b16 %v441
    %v570 = vunpack.c.l.b16 %v442
    %v571 = vunpack.c.l.b16 %v443
    %v572 = vunpack.c.l.b16 %v444
    %v573 = vunpack.c.l.b16 %v445
    %v574 = vunpack.c.l.b16 %v446
    %v575 = vunpack.c.l.b16 %v447
    %v576 = vunpack.c.l.b16 %v448
    %v577 = vunpack.c.l.b16 %v449
    %v578 = vunpack.c.l.b16 %v450
    %v579 = vunpack.c.l.b16 %v451
    %v580 = vunpack.c.l.b16 %v452
    %v581 = vunpack.c.l.b16 %v453
    %v582 = vunpack.c.l.b16 %v454
    %v583 = vunpack.c.l.b16 %v455
    %v584 = vunpack.c.l.b16 %v456
    %v585 = vunpack.c.l.b16 %v457
    %v586 = vunpack.c.l.b16 %v458
    %v587 = vunpack.c.l.b16 %v459
    %v588 = vunpack.c.l.b16 %v460
    %v589 = vunpack.c.l.b16 %v461
    %v590 = vunpack.c.l.b16 %v462
    %v591 = vunpack.c.l.b16 %v463
    %v592 = vunpack.c.l.b16 %v464
    %v593 = vunpack.c.l.b16 %v465
    %v594 = vunpack.c.l.b16 %v466
    %v595 = vunpack.c.l.b16 %v467
    %v596 = vunpack.c.l.b16 %v468
    %v597 = vunpack.c.l.b16 %v469
    %v598 = vunpack.c.l.b16 %v470
    %v599 = vunpack.c.l.b16 %v471
    %v600 = vunpack.c.l.b16 %v472
    %v601 = vunpack.c.l.b16 %v473
    %v602 = vunpack.c.l.b16 %v474
    %v603 = vunpack.c.l.b16 %v475
    %v604 = vunpack.c.l.b16 %v476
    %v605 = vunpack.c.l.b16 %v477
    %v606 = vunpack.c.l.b16 %v478
    %v607 = vunpack.c.l.b16 %v479
    %v608 = vunpack.c.l.b16 %v480
    %v609 = vunpack.c.l.b16 %v481
    %v610 = vunpack.c.l.b16 %v482
    %v611 = vunpack.c.l.b16 %v483
    %v612 = vunpack.c.l.b16 %v484
    %v613 = vunpack.c.l.b16 %v485
    %v614 = vunpack.c.l.b16 %v486
    %v615 = vunpack.c.l.b16 %v487
    %v616 = vunpack.c.l.b16 %v488
    %v617 = vunpack.c.l.b16 %v489
    %v618 = vunpack.c.l.b16 %v490
    %v619 = vunpack.c.l.b16 %v491
    %v620 = vunpack.c.l.b16 %v492
    %v621 = vunpack.c.l.b16 %v493
    %v622 = vunpack.c.l.b16 %v494
    %v623 = vunpack.c.l.b16 %v495
    %v624 = vunpack.c.l.b16 %v496
    %v625 = vunpack.c.l.b16 %v497
    %v626 = vunpack.c.l.b16 %v498
    %v627 = vunpack.c.l.b16 %v499
    %v628 = vpack.c.b16 %v565, %v564
    %v629 = vpack.c.b16 %v567, %v566
    %v630 = vpack.c.b16 %v569, %v568
    %v631 = vpack.c.b16 %v571, %v570
    %v632 = vpack.c.b16 %v573, %v572
    %v633 = vpack.c.b16 %v575, %v574
    %v634 = vpack.c.b16 %v577, %v576
    %v635 = vpack.c.b16 %v579, %v578
    %v636 = vpack.c.b16 %v581, %v580
    %v637 = vpack.c.b16 %v583, %v582
    %v638 = vpack.c.b16 %v585, %v584
    %v639 = vpack.c.b16 %v587, %v586
    %v640 = vpack.c.b16 %v589, %v588
    %v641 = vpack.c.b16 %v591, %v590
    %v642 = vpack.c.b16 %v593, %v592
    %v643 = vpack.c.b16 %v595, %v594
    %v644 = vpack.c.b16 %v597, %v596
    %v645 = vpack.c.b16 %v599, %v598
    %v646 = vpack.c.b16 %v601, %v600
    %v647 = vpack.c.b16 %v603, %v602
    %v648 = vpack.c.b16 %v605, %v604
    %v649 = vpack.c.b16 %v607, %v606
    %v650 = vpack.c.b16 %v609, %v608
    %v651 = vpack.c.b16 %v611, %v610
    %v652 = vpack.c.b16 %v613, %v612
    %v653 = vpack.c.b16 %v615, %v614
    %v654 = vpack.c.b16 %v617, %v616
    %v655 = vpack.c.b16 %v619, %v618
    %v656 = vpack.c.b16 %v621, %v620
    %v657 = vpack.c.b16 %v623, %v622
    %v658 = vpack.c.b16 %v625, %v624
    %v659 = vpack.c.b16 %v627, %v626
    %692 = vmatprep.subr.bf16.mxu0 0
    %693 = vmatpush1.bf16.msra.mxu0 %v635
    %694 = vmatprep.subr.bf16.mxu0 0
    %695 = vmatpush1.bf16.msra.mxu0 %v634
    %696 = vmatprep.subr.bf16.mxu0 0
    %697 = vmatpush1.bf16.msra.mxu0 %v633
    %698 = vmatprep.subr.bf16.mxu0 0
    %699 = vmatpush1.bf16.msra.mxu0 %v632
    %700 = vmatprep.subr.bf16.mxu0 0
    %701 = vmatpush1.bf16.msra.mxu0 %v631
    %702 = vmatprep.subr.bf16.mxu0 0
    %703 = vmatpush1.bf16.msra.mxu0 %v630
    %704 = vmatprep.subr.bf16.mxu0 0
    %705 = vmatpush1.bf16.msra.mxu0 %v629
    %706 = vmatprep.subr.bf16.mxu0 0
    %707 = vmatpush1.bf16.msra.mxu0 %v628
    %708 = vmatprep.subr.bf16.mxu0 0
    %709 = vmatpush2.bf16.msra.mxu0 %v643
    %710 = vmatprep.subr.bf16.mxu0 0
    %711 = vmatpush2.bf16.msra.mxu0 %v642
    %712 = vmatprep.subr.bf16.mxu0 0
    %713 = vmatpush2.bf16.msra.mxu0 %v641
    %714 = vmatprep.subr.bf16.mxu0 0
    %715 = vmatpush2.bf16.msra.mxu0 %v640
    %716 = vmatprep.subr.bf16.mxu0 0
    %717 = vmatpush2.bf16.msra.mxu0 %v639
    %718 = vmatprep.subr.bf16.mxu0 0
    %719 = vmatpush2.bf16.msra.mxu0 %v638
    %720 = vmatprep.subr.bf16.mxu0 0
    %721 = vmatpush2.bf16.msra.mxu0 %v637
    %722 = vmatprep.subr.bf16.mxu0 0
    %723 = vmatpush2.bf16.msra.mxu0 %v636
    %724 = vmatprep.mubr.bf16.mxu0 %v433
    %725 = vmatmul.mubr.bf16.gmra.mxu0 %v432
    %v726 = vpop.f32.mrf.mxu0
    %v727 = vadd.f32 0.0, %v726
    %v728 = vpop.f32.mrf.mxu0
    %v729 = vpop.f32.mrf.mxu0
    %v730 = vadd.f32 0.0, %v729
    %v731 = vpop.f32.mrf.mxu0
    %732 = vdwg.mxu0
    %733 = vmatprep.subr.bf16.mxu0 0
    %734 = vmatpush1.bf16.msra.mxu0 %v651
    %735 = vmatprep.subr.bf16.mxu0 0
    %736 = vmatpush1.bf16.msra.mxu0 %v650
    %737 = vmatprep.subr.bf16.mxu0 0
    %738 = vmatpush1.bf16.msra.mxu0 %v649
    %739 = vmatprep.subr.bf16.mxu0 0
    %740 = vmatpush1.bf16.msra.mxu0 %v648
    %741 = vmatprep.subr.bf16.mxu0 0
    %742 = vmatpush1.bf16.msra.mxu0 %v647
    %743 = vmatprep.subr.bf16.mxu0 0
    %744 = vmatpush1.bf16.msra.mxu0 %v646
    %745 = vmatprep.subr.bf16.mxu0 0
    %746 = vmatpush1.bf16.msra.mxu0 %v645
    %747 = vmatprep.subr.bf16.mxu0 0
    %748 = vmatpush1.bf16.msra.mxu0 %v644
    %749 = vmatprep.subr.bf16.mxu0 0
    %750 = vmatpush2.bf16.msra.mxu0 %v659
    %751 = vmatprep.subr.bf16.mxu0 0
    %752 = vmatpush2.bf16.msra.mxu0 %v658
    %753 = vmatprep.subr.bf16.mxu0 0
    %754 = vmatpush2.bf16.msra.mxu0 %v657
    %755 = vmatprep.subr.bf16.mxu0 0
    %756 = vmatpush2.bf16.msra.mxu0 %v656
    %757 = vmatprep.subr.bf16.mxu0 0
    %758 = vmatpush2.bf16.msra.mxu0 %v655
    %759 = vmatprep.subr.bf16.mxu0 0
    %760 = vmatpush2.bf16.msra.mxu0 %v654
    %761 = vmatprep.subr.bf16.mxu0 0
    %762 = vmatpush2.bf16.msra.mxu0 %v653
    %763 = vmatprep.subr.bf16.mxu0 0
    %764 = vmatpush2.bf16.msra.mxu0 %v652
    %765 = vmatprep.mubr.bf16.mxu0 %v435
    %766 = vmatmul.mubr.bf16.gmra.mxu0 %v434
    %v767 = vpop.f32.mrf.mxu0
    %v768 = vadd.f32 %v727, %v767
    %v769 = vpop.f32.mrf.mxu0
    %v770 = vpop.f32.mrf.mxu0
    %v771 = vadd.f32 %v730, %v770
    %v772 = vpop.f32.mrf.mxu0
    %773 = vdwg.mxu0
    %v774 = vadd.f32 %v430, %v768
    %v775 = vadd.f32 %v431, %v771
    %776 = vst [vmem:[#allocation2] sm:$0xff] %v774
    %777 = vst [vmem:[#allocation2 + $0x8] sm:$0xff] %v775
    // Predicated region
    $region50: #{tpu_custom_call.1} parent=1 // pred_check
      %p778 = pneg %p81
    $region51: #{tpu_custom_call.1} parent=1 // pred_check_branch
      %780 = sbr.rel (%p778) target = $region53
    $region52: #{tpu_custom_call.1} parent=1 // pred_region
      %v781 = vld [vmem:[#allocation2] sm:$0xff]
      %v782 = vld [vmem:[#allocation2 + $0x8] sm:$0xff]
      %v783 = vld [vmem:[%s4] sm:$0x1]
      %v785 = vlaneseq
      %v786 = vshrl.u32 %v785, 7
      %v787 = vsub.s32 0, %v786
      %v788 = vrot.slane %v783, %v787
      %v790 = vadd.f32 %v781, %v788
      %v791 = vadd.f32 %v782, %v788
      %v792 = vld [vmem:[#allocation3] sm:$0xff]
      %v793 = vld [vmem:[#allocation3 + $0x8] sm:$0xff]
      %v794 = vadd.f32 %v790, %v792
      %v795 = vadd.f32 %v791, %v793
      %796 = vadd.xlane.f32.xlu0 %v794
      %v797 = vpop.xlane.xlu0 %796
      %798 = vadd.xlane.f32.xlu0 %v795
      %v799 = vpop.xlane.xlu0 %798
      %v800 = vrcp.pop 128.0
      %v801 = vmul.f32 %v797, %v800
      %v802 = vmul.f32 %v799, %v800
      %v803 = vsub.f32 %v794, %v801
      %v804 = vsub.f32 %v795, %v802
      %v805 = vmul.f32 %v803, %v803
      %v806 = vmul.f32 %v804, %v804
      %807 = vadd.xlane.f32.xlu0 %v805
      %v808 = vpop.xlane.xlu0 %807
      %809 = vadd.xlane.f32.xlu0 %v806
      %v810 = vpop.xlane.xlu0 %809
      %v811 = vmul.f32 %v808, %v800
      %v812 = vmul.f32 %v810, %v800
      %v813 = vadd.f32 %v811, 1e-05
      %v814 = vadd.f32 %v812, 1e-05
      %v815 = vrsqrt.pop %v813
      %v816 = vrsqrt.pop %v814
      %v817 = vmul.f32 %v803, %v815
      %v818 = vmul.f32 %v804, %v816
      %v819 = vld [vmem:[%s5] sm:$0x1]
      %v821 = vlaneseq
      %v822 = vshrl.u32 %v821, 7
      %v823 = vsub.s32 0, %v822
      %v824 = vrot.slane %v819, %v823
      %v826 = vmul.f32 %v817, %v824
      %v827 = vmul.f32 %v818, %v824
      %v828 = vld [vmem:[%s6] sm:$0x1]
      %v830 = vlaneseq
      %v831 = vshrl.u32 %v830, 7
      %v832 = vsub.s32 0, %v831
      %v833 = vrot.slane %v828, %v832
      %v835 = vadd.f32 %v826, %v833
      %v836 = vadd.f32 %v827, %v833
      %837 = vst [vmem:[#allocation11] sm:$0xff] %v835
      %838 = vst [vmem:[#allocation11 + $0x8] sm:$0xff] %v836
    $region53: #{tpu_custom_call.1} parent=1 // pred_fallthru
      _
    // Predicated region
    $region54: #{tpu_custom_call.1} parent=1 // pred_check
      _
    $region55: #{tpu_custom_call.1} parent=1 // pred_check_branch
      %840 = sbr.rel (0) target = $region57
    $region56: #{tpu_custom_call.1} parent=1 // pred_region
      %s842 = ssub.s32 256, 256
      %843 = vsyncadd [#allocation5], %s842
      %s844 = sshll.u32 [#allocation11], 4
      %s845 = int_to_ptr.vmem [resolvable:$true] %s844
      %850 = dma.vmem_to_hbm [thread:$0]  %s845, 256, %s7, [#allocation5], 128, 128, 8
    $region57: #{tpu_custom_call.1} parent=1 // pred_fallthru
      _
    // Predicated region
    $region58: #{tpu_custom_call.1} parent=1 // pred_check
      _
    $region59: #{tpu_custom_call.1} parent=1 // pred_check_branch
      %852 = sbr.rel (0) target = $region61
    $region60: #{tpu_custom_call.1} parent=1 // pred_region
      %853 = dma.done [#allocation5], 256
    $region61: #{tpu_custom_call.1} parent=1 // pred_fallthru
      _
    %854 = vsyncpa [#allocation4], 1
    %855 = vsyncpa [#allocation7], 1
    %856 = vsyncpa [#allocation10], 1
    %857 = vsyncpa [#allocation5], 1

</llo_original>
